<compile_context>
chip_gen: v6e
topology: v6e:2x2x1
jax: 0.10.0
libtpu: 0.0.40
codegen_flags: <defaults>
</compile_context>

<pallas_src>
import functools

import jax
import jax.numpy as jnp
from jax import lax
from jax.experimental import pallas as pl
from jax.experimental.pallas import tpu as pltpu


def _softmax_last(s):
    """Row softmax over the last axis; f32 statistics, approx reciprocal on the EUP."""
    m = jnp.max(s, axis=-1, keepdims=True)
    p = jnp.exp(s - m)
    return p * pl.reciprocal(jnp.sum(p, axis=-1, keepdims=True), approx=True)


def _mra_kernel(x_ref, wbc_ref, bbc_ref, wd_ref, bd_ref, o_ref,
                b_scr, d_scr, y_scr, *, C8, TM, n_row_blocks):
    # x_ref : (1, C, N) f32      wbc: (2*C8, C) bf16   bbc: (2*C8, 1) f32
    # wd    : (C, C) bf16        bd : (C, 1) f32
    # b_scr : (C8, N) bf16       d_scr: (C, N) bf16    y_scr: (C, N) f32
    x = x_ref[0]                               # (C, N) f32
    x_bf = x.astype(jnp.bfloat16)

    # ---- fused 1x1 projections (channel-mixing matmuls, bias broadcast over lanes)
    bc = jnp.dot(wbc_ref[...], x_bf,
                 preferred_element_type=jnp.float32) + bbc_ref[...]      # (2*C8, N)
    d_feat = jnp.dot(wd_ref[...], x_bf,
                     preferred_element_type=jnp.float32) + bd_ref[...]   # (C, N)

    b_scr[...] = bc[:C8].astype(jnp.bfloat16)          # b_feat (C8, N)
    c_bf = bc[C8:].astype(jnp.bfloat16)                # c_feat (C8, N), reused every block
    d_scr[...] = d_feat.astype(jnp.bfloat16)
    y_scr[...] = jnp.zeros_like(y_scr)                 # y_pos accumulator

    # ---- Position attention, row-tiled over the score matrix ---------------------
    # s[n, m] = sum_k b[k, n] * c[k, m]; softmax over m; y_pos[c, m] = sum_n d[c, n] s[n, m]
    # Only a (TM, N) block of s is ever live in VMEM; y_pos accumulates over row blocks.
    @pl.loop(0, n_row_blocks)
    def _row_block(i):
        start = pl.multiple_of(i * TM, TM)
        b_blk = b_scr[:, pl.ds(start, TM)]             # (C8, TM) bf16
        d_blk = d_scr[:, pl.ds(start, TM)]             # (C, TM)  bf16
        # Contraction K = C8 is tiny -> the kernel is EUP/VPU-bound (exp over TM*N
        # elements), not MXU-bound; these matmuls are effectively free filler.
        s_blk = lax.dot_general(b_blk, c_bf, (((0,), (0,)), ((), ())),
                                preferred_element_type=jnp.float32)      # (TM, N)
        p_blk = _softmax_last(s_blk).astype(jnp.bfloat16)
        y_scr[...] += jnp.dot(d_blk, p_blk,
                              preferred_element_type=jnp.float32)        # (C, N)

    # ---- Channel attention (conv_e/f/g are dead code in the reference forward) ---
    a = lax.dot_general(x_bf, x_bf, (((1,), (1,)), ((), ())),
                        preferred_element_type=jnp.float32)              # (C, C) = f @ e^T
    a = _softmax_last(a).astype(jnp.bfloat16)
    y_chan = jnp.dot(a, x_bf, preferred_element_type=jnp.float32)        # (C, N)

    # position branch: x + y_pos; channel branch: y_chan + x; module returns their sum.
    o_ref[0] = 2.0 * x + y_scr[...] + y_chan


def _choose_row_tile(N):
    """Largest score-row block TM (multiple of 128, <=1024, dividing N) whose live
    (TM, N) block stays well inside a v7x-safe per-iteration VMEM budget."""
    if N % 128 != 0:
        return N
    budget = 12 * 2 ** 20          # bytes for s (f32) + exp temp (f32) + p (bf16)
    tm = 128
    cand = 128
    while cand <= min(N, 1024):
        if N % cand == 0 and cand * N * 10 <= budget:
            tm = cand
        cand += 128
    return tm


def _vmem_limit_bytes(C, C8, N, TM):
    f32, bf16 = 4, 2
    io = 2 * 2 * C * N * f32                              # double-buffered x + out blocks
    weights = (2 * C8 * C + C * C) * bf16 + (2 * C8 + C) * f32
    scratch = C8 * N * bf16 + C * N * (bf16 + f32)
    inner = TM * N * (2 * f32 + bf16)                     # s block, exp temp, p block
    chan = 3 * C * C * f32 + C * N * f32
    est = io + weights + scratch + inner + chan
    # Raise the scoped defaults (16 MiB v5e / 32 MiB v6e,v7x) but cap at 48 MiB so the
    # request is always safe under v7x's 64 MiB physical VMEM.
    return int(min(max(2 * est, 32 * 2 ** 20), 48 * 2 ** 20))


def multi_resolution_attention(x, params, *, interpret=False):
    """x: (B, C, H, W) float32 NCHW. Returns (B, C, H, W) float32."""
    B, C, H, W = x.shape
    N = H * W
    C8 = C // 8
    assert C8 >= 1, "in_channels must be >= 8 (conv_b/conv_c project to C // 8 channels)"
    xf = x.reshape(B, C, N).astype(jnp.float32)

    # Fuse conv_b / conv_c into one stacked projection; weights bf16 for the MXU,
    # biases stay f32 (added after f32 accumulation).
    w_bc = jnp.concatenate([params["wb"], params["wc"]], axis=0).astype(jnp.bfloat16)  # (2*C8, C)
    b_bc = jnp.concatenate([params["bb"], params["bc"]], axis=0).reshape(2 * C8, 1)
    w_d = params["wd"].astype(jnp.bfloat16)                                            # (C, C)
    b_d = params["bd"].reshape(C, 1)

    TM = _choose_row_tile(N)
    n_row_blocks = N // TM

    kernel = functools.partial(_mra_kernel, C8=C8, TM=TM, n_row_blocks=n_row_blocks)
    full = lambda shape: pl.BlockSpec(shape, lambda b: (0, 0))

    out = pl.pallas_call(
        kernel,
        out_shape=jax.ShapeDtypeStruct((B, C, N), jnp.float32),
        grid_spec=pltpu.PrefetchScalarGridSpec(
            num_scalar_prefetch=0,
            grid=(B,),
            in_specs=[
                pl.BlockSpec((1, C, N), lambda b: (b, 0, 0)),    # x
                full((2 * C8, C)), full((2 * C8, 1)),            # fused conv_b | conv_c
                full((C, C)), full((C, 1)),                      # conv_d
            ],
            out_specs=pl.BlockSpec((1, C, N), lambda b: (b, 0, 0)),
            scratch_shapes=[
                pltpu.VMEM((C8, N), jnp.bfloat16),   # b_feat
                pltpu.VMEM((C, N), jnp.bfloat16),    # d_feat
                pltpu.VMEM((C, N), jnp.float32),     # y_pos accumulator
            ],
        ),
        compiler_params=pltpu.CompilerParams(
            dimension_semantics=("parallel",),
            vmem_limit_bytes=_vmem_limit_bytes(C, C8, N, TM),
        ),
        interpret=interpret,
    )(xf, w_bc, b_bc, w_d, b_d)

    return out.reshape(B, C, H, W)


def reference(x, params):
    """Pure-JAX f32 reference of the PyTorch forward."""
    B, C, H, W = x.shape
    N = H * W
    xf = x.reshape(B, C, N)

    def conv1x1(w, b, xf_):
        return jnp.einsum("oc,bcn->bon", w, xf_) + b[None, :, None]

    # Position attention
    bf = conv1x1(params["wb"], params["bb"], xf)   # (B, C8, N)
    cf = conv1x1(params["wc"], params["bc"], xf)   # (B, C8, N)
    df = conv1x1(params["wd"], params["bd"], xf)   # (B, C,  N)
    s = jnp.einsum("bkn,bkm->bnm", bf, cf)         # (B, N, N)
    s = jax.nn.softmax(s, axis=-1)
    y_pos = jnp.einsum("bcn,bnm->bcm", df, s)      # (B, C, N)
    pos = xf + y_pos

    # Channel attention (convs e/f/g are dead in the reference forward)
    a = jnp.einsum("bcn,bdn->bcd", xf, xf)         # (B, C, C)
    a = jax.nn.softmax(a, axis=-1)
    y_chan = jnp.einsum("bcd,bdn->bcn", a, xf)     # (B, C, N)
    chan = y_chan + xf

    return (pos + chan).reshape(B, C, H, W)


def init_params(key, C):
    C8 = C // 8
    keys = jax.random.split(key, 12)
    scale = 0.1
    return {
        # PositionAttentionModule params (used)
        "wb": scale * jax.random.normal(keys[0], (C8, C), jnp.float32),
        "bb": scale * jax.random.normal(keys[1], (C8,), jnp.float32),
        "wc": scale * jax.random.normal(keys[2], (C8, C), jnp.float32),
        "bc": scale * jax.random.normal(keys[3], (C8,), jnp.float32),
        "wd": scale * jax.random.normal(keys[4], (C, C), jnp.float32),
        "bd": scale * jax.random.normal(keys[5], (C,), jnp.float32),
        # ChannelAttentionModule conv_e/f/g exist in __init__ but their outputs are
        # overwritten in forward (dead code) — initialized for fidelity, unused.
        "we": scale * jax.random.normal(keys[6], (C, C), jnp.float32),
        "be": scale * jax.random.normal(keys[7], (C,), jnp.float32),
        "wf": scale * jax.random.normal(keys[8], (C, C), jnp.float32),
        "bf": scale * jax.random.normal(keys[9], (C,), jnp.float32),
        "wg": scale * jax.random.normal(keys[10], (C, C), jnp.float32),
        "bg": scale * jax.random.normal(keys[11], (C,), jnp.float32),
    }


if __name__ == "__main__":
    B, C, H, W = 2, 16, 16, 16   # C must be >= 8 (conv_b/conv_c project to C // 8 channels)
    key = jax.random.PRNGKey(0)
    kx, kp = jax.random.split(key)
    x = jax.random.normal(kx, (B, C, H, W), jnp.float32)
    params = init_params(kp, C)

    out = jax.block_until_ready(multi_resolution_attention(x, params))
    ref = reference(x, params)

    # bf16 MXU inputs (f32 accumulation) -> tolerance relaxed vs. the pure-f32 reference.
    if not jnp.allclose(out, ref, atol=2e-2, rtol=2e-2):
        err = float(jnp.max(jnp.abs(out - ref)))
        raise AssertionError(f"Pallas kernel does not match JAX reference (max abs err {err:.3e})")

    print("KERNEL_OK")
</pallas_src>

<mosaic_0001>
module attributes {stable_mosaic.version = 11 : i64} {
  func.func @_mra_kernel(%arg0: i32, %arg1: memref<1x16x256xf32, #tpu.memory_space<vmem>>, %arg2: memref<4x16xbf16, #tpu.memory_space<vmem>>, %arg3: memref<4x1xf32, #tpu.memory_space<vmem>>, %arg4: memref<16x16xbf16, #tpu.memory_space<vmem>>, %arg5: memref<16x1xf32, #tpu.memory_space<vmem>>, %arg6: memref<1x16x256xf32, #tpu.memory_space<vmem>>, %arg7: memref<2x256xbf16, #tpu.memory_space<vmem>>, %arg8: memref<16x256xbf16, #tpu.memory_space<vmem>>, %arg9: memref<16x256xf32, #tpu.memory_space<vmem>>) attributes {dimension_semantics = [#tpu.dimension_semantics<parallel>], iteration_bounds = array<i64: 2>, scalar_prefetch = 0 : i64, scratch_operands = 3 : i64, tpu.core_type = #tpu.core_type<tc>, window_params = [{transform_indices = @transform_0, window_bounds = array<i64: 1, 16, 256>}, {pipeline_mode = #tpu.pipeline_mode<synchronous>, transform_indices = @transform_1, window_bounds = array<i64: 4, 16>}, {pipeline_mode = #tpu.pipeline_mode<synchronous>, transform_indices = @transform_2, window_bounds = array<i64: 4, 1>}, {pipeline_mode = #tpu.pipeline_mode<synchronous>, transform_indices = @transform_3, window_bounds = array<i64: 16, 16>}, {pipeline_mode = #tpu.pipeline_mode<synchronous>, transform_indices = @transform_4, window_bounds = array<i64: 16, 1>}, {transform_indices = @transform_5, window_bounds = array<i64: 1, 16, 256>}]} {
    %c0 = arith.constant 0 : index
    %c0_0 = arith.constant 0 : index
    %c0_1 = arith.constant 0 : index
    %0 = vector.load %arg1[%c0, %c0_0, %c0_1] : memref<1x16x256xf32, #tpu.memory_space<vmem>>, vector<1x16x256xf32>
    %1 = vector.shape_cast %0 : vector<1x16x256xf32> to vector<16x256xf32>
    %2 = arith.truncf %1 : vector<16x256xf32> to vector<16x256xbf16>
    %c0_2 = arith.constant 0 : index
    %c0_3 = arith.constant 0 : index
    %3 = vector.load %arg2[%c0_2, %c0_3] : memref<4x16xbf16, #tpu.memory_space<vmem>>, vector<4x16xbf16>
    %cst = arith.constant dense<0.000000e+00> : vector<4x256xf32>
    %4 = tpu.matmul %3, %2, %cst {dimension_numbers = #tpu.dot_dimension_numbers<[1], [0], [0], [1], [0, 0, 1, 1], [], []>} : vector<4x16xbf16>, vector<16x256xbf16>, vector<4x256xf32> -> vector<4x256xf32>
    %c0_4 = arith.constant 0 : index
    %c0_5 = arith.constant 0 : index
    %5 = vector.load %arg3[%c0_4, %c0_5] : memref<4x1xf32, #tpu.memory_space<vmem>>, vector<4x1xf32>
    %6 = vector.broadcast %5 : vector<4x1xf32> to vector<4x256xf32>
    %7 = arith.addf %4, %6 : vector<4x256xf32>
    %c0_6 = arith.constant 0 : index
    %c0_7 = arith.constant 0 : index
    %8 = vector.load %arg4[%c0_6, %c0_7] : memref<16x16xbf16, #tpu.memory_space<vmem>>, vector<16x16xbf16>
    %cst_8 = arith.constant dense<0.000000e+00> : vector<16x256xf32>
    %9 = tpu.matmul %8, %2, %cst_8 {dimension_numbers = #tpu.dot_dimension_numbers<[1], [0], [0], [1], [0, 0, 1, 1], [], []>} : vector<16x16xbf16>, vector<16x256xbf16>, vector<16x256xf32> -> vector<16x256xf32>
    %c0_9 = arith.constant 0 : index
    %c0_10 = arith.constant 0 : index
    %10 = vector.load %arg5[%c0_9, %c0_10] : memref<16x1xf32, #tpu.memory_space<vmem>>, vector<16x1xf32>
    %11 = vector.broadcast %10 : vector<16x1xf32> to vector<16x256xf32>
    %12 = arith.addf %9, %11 : vector<16x256xf32>
    %13 = vector.extract_strided_slice %7 {offsets = [0, 0], sizes = [2, 256], strides = [1, 1]} : vector<4x256xf32> to vector<2x256xf32>
    %14 = arith.truncf %13 : vector<2x256xf32> to vector<2x256xbf16>
    %c0_11 = arith.constant 0 : index
    %c0_12 = arith.constant 0 : index
    %15 = vector.load %arg7[%c0_11, %c0_12] : memref<2x256xbf16, #tpu.memory_space<vmem>>, vector<2x256xbf16>
    tpu.vector_store %arg7[%c0_11, %c0_12], %14 {strides = array<i32>} : memref<2x256xbf16, #tpu.memory_space<vmem>>, vector<2x256xbf16>,
    %16 = vector.extract_strided_slice %7 {offsets = [2, 0], sizes = [2, 256], strides = [1, 1]} : vector<4x256xf32> to vector<2x256xf32>
    %17 = arith.truncf %16 : vector<2x256xf32> to vector<2x256xbf16>
    %18 = arith.truncf %12 : vector<16x256xf32> to vector<16x256xbf16>
    %c0_13 = arith.constant 0 : index
    %c0_14 = arith.constant 0 : index
    %19 = vector.load %arg8[%c0_13, %c0_14] : memref<16x256xbf16, #tpu.memory_space<vmem>>, vector<16x256xbf16>
    tpu.vector_store %arg8[%c0_13, %c0_14], %18 {strides = array<i32>} : memref<16x256xbf16, #tpu.memory_space<vmem>>, vector<16x256xbf16>,
    %cst_15 = arith.constant 0.000000e+00 : f32
    %20 = vector.broadcast %cst_15 : f32 to vector<16x256xf32>
    %c0_16 = arith.constant 0 : index
    %c0_17 = arith.constant 0 : index
    %21 = vector.load %arg9[%c0_16, %c0_17] : memref<16x256xf32, #tpu.memory_space<vmem>>, vector<16x256xf32>
    tpu.vector_store %arg9[%c0_16, %c0_17], %20 {strides = array<i32>} : memref<16x256xf32, #tpu.memory_space<vmem>>, vector<16x256xf32>,
    %c0_i32 = arith.constant 0 : i32
    %c1_i32 = arith.constant 1 : i32
    %22 = arith.muli %c0_i32, %c1_i32 : i32
    %c0_i32_18 = arith.constant 0 : i32
    %23 = arith.addi %c0_i32_18, %22 : i32
    %c256_i32 = arith.constant 256 : i32
    %24 = arith.muli %23, %c256_i32 : i32
    %25 = tpu.assume_multiple %24, 256 : i32
    %c0_19 = arith.constant 0 : index
    %26 = arith.index_cast %25 : i32 to index
    %27 = vector.load %arg7[%c0_19, %26] : memref<2x256xbf16, #tpu.memory_space<vmem>>, vector<2x256xbf16>
    %c0_20 = arith.constant 0 : index
    %28 = arith.index_cast %25 : i32 to index
    %29 = vector.load %arg8[%c0_20, %28] : memref<16x256xbf16, #tpu.memory_space<vmem>>, vector<16x256xbf16>
    %cst_21 = arith.constant dense<0.000000e+00> : vector<256x256xf32>
    %30 = tpu.matmul %27, %17, %cst_21 {dimension_numbers = #tpu.dot_dimension_numbers<[0], [0], [1], [1], [0, 1, 1, 1], [], []>} : vector<2x256xbf16>, vector<2x256xbf16>, vector<256x256xf32> -> vector<256x256xf32>
    %cst_22 = arith.constant dense<0xFF800000> : vector<256xf32>
    %31 = vector.multi_reduction <maximumf>, %30, %cst_22 [1] : vector<256x256xf32> to vector<256xf32>
    %32 = vector.shape_cast %31 : vector<256xf32> to vector<256x1xf32>
    %33 = vector.broadcast %32 : vector<256x1xf32> to vector<256x256xf32>
    %34 = arith.subf %30, %33 : vector<256x256xf32>
    %35 = math.exp %34 : vector<256x256xf32>
    %cst_23 = arith.constant dense<0.000000e+00> : vector<256xf32>
    %36 = vector.multi_reduction <add>, %35, %cst_23 [1] : vector<256x256xf32> to vector<256xf32>
    %37 = vector.shape_cast %36 : vector<256xf32> to vector<256x1xf32>
    %38 = tpu.reciprocal %37 {approx = true} : vector<256x1xf32> -> vector<256x1xf32>
    %39 = vector.broadcast %38 : vector<256x1xf32> to vector<256x256xf32>
    %40 = arith.mulf %35, %39 : vector<256x256xf32>
    %41 = arith.truncf %40 : vector<256x256xf32> to vector<256x256xbf16>
    %c0_24 = arith.constant 0 : index
    %c0_25 = arith.constant 0 : index
    %42 = vector.load %arg9[%c0_24, %c0_25] : memref<16x256xf32, #tpu.memory_space<vmem>>, vector<16x256xf32>
    %cst_26 = arith.constant dense<0.000000e+00> : vector<16x256xf32>
    %43 = tpu.matmul %29, %41, %cst_26 {dimension_numbers = #tpu.dot_dimension_numbers<[1], [0], [0], [1], [0, 0, 1, 1], [], []>} : vector<16x256xbf16>, vector<256x256xbf16>, vector<16x256xf32> -> vector<16x256xf32>
    %44 = arith.addf %42, %43 : vector<16x256xf32>
    %c0_27 = arith.constant 0 : index
    %c0_28 = arith.constant 0 : index
    %45 = vector.load %arg9[%c0_27, %c0_28] : memref<16x256xf32, #tpu.memory_space<vmem>>, vector<16x256xf32>
    tpu.vector_store %arg9[%c0_27, %c0_28], %44 {strides = array<i32>} : memref<16x256xf32, #tpu.memory_space<vmem>>, vector<16x256xf32>,
    %c1_i32_29 = arith.constant 1 : i32
    %cst_30 = arith.constant dense<0.000000e+00> : vector<16x16xf32>
    %46 = tpu.matmul %2, %2, %cst_30 {dimension_numbers = #tpu.dot_dimension_numbers<[1], [1], [0], [0], [0, 0, 1, 0], [], []>} : vector<16x256xbf16>, vector<16x256xbf16>, vector<16x16xf32> -> vector<16x16xf32>
    %cst_31 = arith.constant dense<0xFF800000> : vector<16xf32>
    %47 = vector.multi_reduction <maximumf>, %46, %cst_31 [1] : vector<16x16xf32> to vector<16xf32>
    %48 = vector.shape_cast %47 : vector<16xf32> to vector<16x1xf32>
    %49 = vector.broadcast %48 : vector<16x1xf32> to vector<16x16xf32>
    %50 = arith.subf %46, %49 : vector<16x16xf32>
    %51 = math.exp %50 : vector<16x16xf32>
    %cst_32 = arith.constant dense<0.000000e+00> : vector<16xf32>
    %52 = vector.multi_reduction <add>, %51, %cst_32 [1] : vector<16x16xf32> to vector<16xf32>
    %53 = vector.shape_cast %52 : vector<16xf32> to vector<16x1xf32>
    %54 = tpu.reciprocal %53 {approx = true} : vector<16x1xf32> -> vector<16x1xf32>
    %55 = vector.broadcast %54 : vector<16x1xf32> to vector<16x16xf32>
    %56 = arith.mulf %51, %55 : vector<16x16xf32>
    %57 = arith.truncf %56 : vector<16x16xf32> to vector<16x16xbf16>
    %cst_33 = arith.constant dense<0.000000e+00> : vector<16x256xf32>
    %58 = tpu.matmul %57, %2, %cst_33 {dimension_numbers = #tpu.dot_dimension_numbers<[1], [0], [0], [1], [0, 0, 1, 1], [], []>} : vector<16x16xbf16>, vector<16x256xbf16>, vector<16x256xf32> -> vector<16x256xf32>
    %cst_34 = arith.constant 2.000000e+00 : f32
    %59 = vector.broadcast %cst_34 : f32 to vector<16x256xf32>
    %60 = arith.mulf %59, %1 : vector<16x256xf32>
    %c0_35 = arith.constant 0 : index
    %c0_36 = arith.constant 0 : index
    %61 = vector.load %arg9[%c0_35, %c0_36] : memref<16x256xf32, #tpu.memory_space<vmem>>, vector<16x256xf32>
    %62 = arith.addf %60, %61 : vector<16x256xf32>
    %63 = arith.addf %62, %58 : vector<16x256xf32>
    %c0_37 = arith.constant 0 : index
    %c0_38 = arith.constant 0 : index
    %c0_39 = arith.constant 0 : index
    %64 = vector.load %arg6[%c0_37, %c0_38, %c0_39] : memref<1x16x256xf32, #tpu.memory_space<vmem>>, vector<1x16x256xf32>
    %65 = vector.shape_cast %64 : vector<1x16x256xf32> to vector<16x256xf32>
    %66 = vector.shape_cast %63 : vector<16x256xf32> to vector<1x16x256xf32>
    tpu.vector_store %arg6[%c0_37, %c0_38, %c0_39], %66 {strides = array<i32>} : memref<1x16x256xf32, #tpu.memory_space<vmem>>, vector<1x16x256xf32>,
    return
  }
  func.func @transform_0(%arg0: i32) -> (i32, i32, i32) {
    %c0_i32 = arith.constant 0 : i32
    %c0_i32_0 = arith.constant 0 : i32
    %c0_i32_1 = arith.constant 0 : i32
    return %arg0, %c0_i32, %c0_i32_0 : i32, i32, i32
  }
  func.func @transform_1(%arg0: i32) -> (i32, i32) {
    %c0_i32 = arith.constant 0 : i32
    %c0_i32_0 = arith.constant 0 : i32
    %c0_i32_1 = arith.constant 0 : i32
    return %c0_i32, %c0_i32_0 : i32, i32
  }
  func.func @transform_2(%arg0: i32) -> (i32, i32) {
    %c0_i32 = arith.constant 0 : i32
    %c0_i32_0 = arith.constant 0 : i32
    %c0_i32_1 = arith.constant 0 : i32
    return %c0_i32, %c0_i32_0 : i32, i32
  }
  func.func @transform_3(%arg0: i32) -> (i32, i32) {
    %c0_i32 = arith.constant 0 : i32
    %c0_i32_0 = arith.constant 0 : i32
    %c0_i32_1 = arith.constant 0 : i32
    return %c0_i32, %c0_i32_0 : i32, i32
  }
  func.func @transform_4(%arg0: i32) -> (i32, i32) {
    %c0_i32 = arith.constant 0 : i32
    %c0_i32_0 = arith.constant 0 : i32
    %c0_i32_1 = arith.constant 0 : i32
    return %c0_i32, %c0_i32_0 : i32, i32
  }
  func.func @transform_5(%arg0: i32) -> (i32, i32, i32) {
    %c0_i32 = arith.constant 0 : i32
    %c0_i32_0 = arith.constant 0 : i32
    %c0_i32_1 = arith.constant 0 : i32
    return %arg0, %c0_i32, %c0_i32_0 : i32, i32, i32
  }
}

</mosaic_0001>

<llo_original>
// kernel: tpu_custom_call.1
$region0: #{tpu_custom_call.1}
  #allocation0 [shape = 'u32[]', space=smem, size = 0x4, offset = 0x4, fixed_abs, tag = 'smem constant byte address 0x4 - core index']
  #allocation1 [shape = 'u32[144,128]{1,0:T(1,128)}', space=vmem, size = 0x12000, scoped, tag = 'internal scratch']
  #allocation2 [shape = 'bf16[2,256]{1,0:T(2,128)(2,1)}', space=vmem, size = 0x400, scoped, tag = 'scratch operand']
  #allocation3 [shape = 'bf16[16,256]{1,0:T(8,128)(2,1)}', space=vmem, size = 0x2000, scoped, tag = 'scratch operand']
  #allocation4 [shape = 'f32[16,256]{1,0:T(8,128)}', space=vmem, size = 0x4000, scoped, tag = 'scratch operand']
  %s0 = inlined_call_operand.hbm [shape: f32[2,16,256], index: 0, kind: input, shape index: {}]
  %s1 = inlined_call_operand.vmem [shape: bf16[4,16], index: 1, kind: input, shape index: {}]
  %s2 = inlined_call_operand.vmem [shape: f32[4,1], index: 2, kind: input, shape index: {}]
  %s3 = inlined_call_operand.vmem [shape: bf16[16,16], index: 3, kind: input, shape index: {}]
  %s4 = inlined_call_operand.vmem [shape: f32[16,1], index: 4, kind: input, shape index: {}]
  %s5 = inlined_call_operand.hbm [shape: f32[2,16,256], index: 5, kind: output, shape index: {}]
  %s6 = sld [smem:[#allocation0]]
  $region57: #{tpu_custom_call.1} parent=0
    _
  %s8 = ssub.s32 1, %s6
  %s9 = scalar_select 0, %s8, %s6
  $region1: #{tpu_custom_call.1} parent=0
    #allocation5 [shape = 'u8[32768]{0}', space=vmem, size = 0x8000, scoped, tag = 'input window, operand 0']
    #allocation6 [shape = 's32[2]{0}', space=sflag, size = 0x8, scoped, tag = 'scoped memory for tpu_custom_call.1']
    #allocation7 [shape = 's32[2]{0}', space=sflag, size = 0x8, scoped, tag = 'scoped memory for tpu_custom_call.1']
    #allocation8 [shape = 'u8[32768]{0}', space=vmem, size = 0x8000, scoped, tag = 'output window, operand 0']
    %10 = vsyncpa [#allocation6], 0
    %s11 = scalar_lea.sflag [#allocation6], 1
    %12 = vsyncpa %s11, 0
    %13 = vsyncpa [#allocation7], 0
    %s14 = scalar_lea.sflag [#allocation7], 1
    %15 = vsyncpa %s14, 0
    loop: start=0, step=1, limit=4
    $region2: #{tpu_custom_call.1} parent=1 // loop_pre_header
      _
    $region3: #{tpu_custom_call.1} parent=1 // loop_header
      %s17 = sphi 0, %s21
      %p18 = scmp.ge.s32.totalorder %s17, 4
      %s27 = sphi 0, %s29
      %s30 = sphi 0, %s27
      %s31 = sphi 0, %s30
      %s47 = sphi 0, %s31
      %s51 = sphi 0, %s51
      %s53 = sphi 0, %s51
      %s54 = sphi 0, %s53
      %s68 = sphi 0, %s54
      %s72 = sphi 0, %s72
      %s74 = sphi 0, %s72
      %s75 = sphi 0, %s74
      %s89 = sphi 0, %s75
      %s93 = sphi 0, %s93
      %s95 = sphi 0, %s93
      %s96 = sphi 0, %s95
      %s110 = sphi 0, %s96
      %s114 = sphi 0, %s114
      %s116 = sphi 0, %s114
      %s117 = sphi 0, %s116
      %s131 = sphi 0, %s117
      %s137 = sphi 0, %s139
      %s140 = sphi 0, %s137
      %s141 = sphi 0, %s140
      %s157 = sphi 0, %s141
    $region4: #{tpu_custom_call.1} parent=1 // loop_header_branch
      %20 = sbr.rel (%p18) target = $region8
    $region5: #{tpu_custom_call.1} parent=1 // loop_body
      %s22 = ssub.s32 %s17, 1
      %s23 = ssub.s32 %s17, 2
      %s24 = sadd.s32 %s17, 1
      %s25 = ssub.s32 %s17, %s24
      %p26 = scmp.eq.s32.totalorder %s25, 0
      %s28 = sadd.s32 %s27, 1
      %s29 = scalar_select %p26, %s27, %s28
      %p32 = pneg %p26
      %p33 = scmp.eq.s32.totalorder %s17, 1
      %p34 = por %p32, %p33
      %p35 = scmp.ne.s32.totalorder %s27, %s30
      %p36 = scmp.eq.s32.totalorder %s17, 0
      %p37 = por %p35, %p36
      %p38 = scmp.ne.s32.totalorder %s27, %s30
      %p39 = scmp.eq.s32.totalorder %s22, 1
      %p40 = por %p38, %p39
      %p41 = scmp.ne.s32.totalorder %s30, %s31
      %p42 = scmp.eq.s32.totalorder %s22, 0
      %p43 = por %p41, %p42
      %p44 = scmp.ne.s32.totalorder %s30, %s31
      %p45 = scmp.eq.s32.totalorder %s23, 1
      %p46 = por %p44, %p45
      %p48 = scmp.ne.s32.totalorder %s31, %s47
      %p49 = scmp.eq.s32.totalorder %s23, 0
      %p50 = por %p48, %p49
      %s52 = sadd.s32 %s51, 1
      %p55 = scmp.eq.s32.totalorder %s17, 1
      %p56 = scmp.ne.s32.totalorder %s51, %s53
      %p57 = scmp.eq.s32.totalorder %s17, 0
      %p58 = por %p56, %p57
      %p59 = scmp.ne.s32.totalorder %s51, %s53
      %p60 = scmp.eq.s32.totalorder %s22, 1
      %p61 = por %p59, %p60
      %p62 = scmp.ne.s32.totalorder %s53, %s54
      %p63 = scmp.eq.s32.totalorder %s22, 0
      %p64 = por %p62, %p63
      %p65 = scmp.ne.s32.totalorder %s53, %s54
      %p66 = scmp.eq.s32.totalorder %s23, 1
      %p67 = por %p65, %p66
      %p69 = scmp.ne.s32.totalorder %s54, %s68
      %p70 = scmp.eq.s32.totalorder %s23, 0
      %p71 = por %p69, %p70
      %s73 = sadd.s32 %s72, 1
      %p76 = scmp.eq.s32.totalorder %s17, 1
      %p77 = scmp.ne.s32.totalorder %s72, %s74
      %p78 = scmp.eq.s32.totalorder %s17, 0
      %p79 = por %p77, %p78
      %p80 = scmp.ne.s32.totalorder %s72, %s74
      %p81 = scmp.eq.s32.totalorder %s22, 1
      %p82 = por %p80, %p81
      %p83 = scmp.ne.s32.totalorder %s74, %s75
      %p84 = scmp.eq.s32.totalorder %s22, 0
      %p85 = por %p83, %p84
      %p86 = scmp.ne.s32.totalorder %s74, %s75
      %p87 = scmp.eq.s32.totalorder %s23, 1
      %p88 = por %p86, %p87
      %p90 = scmp.ne.s32.totalorder %s75, %s89
      %p91 = scmp.eq.s32.totalorder %s23, 0
      %p92 = por %p90, %p91
      %s94 = sadd.s32 %s93, 1
      %p97 = scmp.eq.s32.totalorder %s17, 1
      %p98 = scmp.ne.s32.totalorder %s93, %s95
      %p99 = scmp.eq.s32.totalorder %s17, 0
      %p100 = por %p98, %p99
      %p101 = scmp.ne.s32.totalorder %s93, %s95
      %p102 = scmp.eq.s32.totalorder %s22, 1
      %p103 = por %p101, %p102
      %p104 = scmp.ne.s32.totalorder %s95, %s96
      %p105 = scmp.eq.s32.totalorder %s22, 0
      %p106 = por %p104, %p105
      %p107 = scmp.ne.s32.totalorder %s95, %s96
      %p108 = scmp.eq.s32.totalorder %s23, 1
      %p109 = por %p107, %p108
      %p111 = scmp.ne.s32.totalorder %s96, %s110
      %p112 = scmp.eq.s32.totalorder %s23, 0
      %p113 = por %p111, %p112
      %s115 = sadd.s32 %s114, 1
      %p118 = scmp.eq.s32.totalorder %s17, 1
      %p119 = scmp.ne.s32.totalorder %s114, %s116
      %p120 = scmp.eq.s32.totalorder %s17, 0
      %p121 = por %p119, %p120
      %p122 = scmp.ne.s32.totalorder %s114, %s116
      %p123 = scmp.eq.s32.totalorder %s22, 1
      %p124 = por %p122, %p123
      %p125 = scmp.ne.s32.totalorder %s116, %s117
      %p126 = scmp.eq.s32.totalorder %s22, 0
      %p127 = por %p125, %p126
      %p128 = scmp.ne.s32.totalorder %s116, %s117
      %p129 = scmp.eq.s32.totalorder %s23, 1
      %p130 = por %p128, %p129
      %p132 = scmp.ne.s32.totalorder %s117, %s131
      %p133 = scmp.eq.s32.totalorder %s23, 0
      %p134 = por %p132, %p133
      %s135 = ssub.s32 %s17, %s24
      %p136 = scmp.eq.s32.totalorder %s135, 0
      %s138 = sadd.s32 %s137, 1
      %s139 = scalar_select %p136, %s137, %s138
      %p142 = pneg %p136
      %p143 = scmp.eq.s32.totalorder %s17, 1
      %p144 = por %p142, %p143
      %p145 = scmp.ne.s32.totalorder %s137, %s140
      %p146 = scmp.eq.s32.totalorder %s17, 0
      %p147 = por %p145, %p146
      %p148 = scmp.ne.s32.totalorder %s137, %s140
      %p149 = scmp.eq.s32.totalorder %s22, 1
      %p150 = por %p148, %p149
      %p151 = scmp.ne.s32.totalorder %s140, %s141
      %p152 = scmp.eq.s32.totalorder %s22, 0
      %p153 = por %p151, %p152
      %p154 = scmp.ne.s32.totalorder %s140, %s141
      %p155 = scmp.eq.s32.totalorder %s23, 1
      %p156 = por %p154, %p155
      %p158 = scmp.ne.s32.totalorder %s141, %s157
      %p159 = scmp.eq.s32.totalorder %s23, 0
      %p160 = por %p158, %p159
      %p161 = scmp.le.s32.totalorder 1, %s17
      %p162 = scmp.lt.s32.totalorder %s17, 3
      %p163 = pnand %p161, %p162
      %p164 = pneg %p163
      // Predicated region
      $region9: #{tpu_custom_call.1} parent=5 // pred_check
        _
      $region10: #{tpu_custom_call.1} parent=5 // pred_check_branch
        %166 = sbr.rel (%p163) target = $region12
      $region11: #{tpu_custom_call.1} parent=5 // pred_region
        %s167 = ssub.s32 %s17, 1
        // Predicated region
        $region13: #{tpu_custom_call.1} parent=11 // pred_check
          %p168 = pneg %p64
        $region14: #{tpu_custom_call.1} parent=11 // pred_check_branch
          %170 = sbr.rel (%p168) target = $region16
        $region15: #{tpu_custom_call.1} parent=11 // pred_region
          _
        $region16: #{tpu_custom_call.1} parent=11 // pred_fallthru
          _
        // Predicated region
        $region17: #{tpu_custom_call.1} parent=11 // pred_check
          %p171 = pneg %p85
        $region18: #{tpu_custom_call.1} parent=11 // pred_check_branch
          %173 = sbr.rel (%p171) target = $region20
        $region19: #{tpu_custom_call.1} parent=11 // pred_region
          _
        $region20: #{tpu_custom_call.1} parent=11 // pred_fallthru
          _
        // Predicated region
        $region21: #{tpu_custom_call.1} parent=11 // pred_check
          %p174 = pneg %p106
        $region22: #{tpu_custom_call.1} parent=11 // pred_check_branch
          %176 = sbr.rel (%p174) target = $region24
        $region23: #{tpu_custom_call.1} parent=11 // pred_region
          _
        $region24: #{tpu_custom_call.1} parent=11 // pred_fallthru
          _
        // Predicated region
        $region25: #{tpu_custom_call.1} parent=11 // pred_check
          %p177 = pneg %p127
        $region26: #{tpu_custom_call.1} parent=11 // pred_check_branch
          %179 = sbr.rel (%p177) target = $region28
        $region27: #{tpu_custom_call.1} parent=11 // pred_region
          _
        $region28: #{tpu_custom_call.1} parent=11 // pred_fallthru
          _
      $region12: #{tpu_custom_call.1} parent=5 // pred_fallthru
        _
      %p180 = scmp.lt.s32.totalorder %s17, 2
      // Predicated region
      $region29: #{tpu_custom_call.1} parent=5 // pred_check
        %p181 = pneg %p180
      $region30: #{tpu_custom_call.1} parent=5 // pred_check_branch
        %183 = sbr.rel (%p181) target = $region32
      $region31: #{tpu_custom_call.1} parent=5 // pred_region
        // Predicated region
        $region33: #{tpu_custom_call.1} parent=31 // pred_check
          %p184 = pneg %p37
        $region34: #{tpu_custom_call.1} parent=31 // pred_check_branch
          %186 = sbr.rel (%p184) target = $region36
        $region35: #{tpu_custom_call.1} parent=31 // pred_region
          %s187 = sand.u32 %s27, 1
          %s188 = scalar_lea.sflag [#allocation6], %s187
          %s189 = sand.u32 %s27, 1
          %s190 = smul.addr %s189, 32
          %s191 = scalar_lea.vmem [#allocation5], %s190
          %s193 = ssub.s32 512, 512
          %194 = vsyncadd %s188, %s193
          %s195 = smul.addr %s17, 4
          %s196 = smul.addr %s195, 128
          %s197 = scalar_lea.hbm %s0, %s196
          %s198 = sshll.u32 %s191, 4
          %s199 = int_to_ptr.vmem [resolvable:$true] %s198
          %204 = dma.hbm_to_vmem [thread:$0]  %s197, 512, %s199, %s188, 256, 256, 16
        $region36: #{tpu_custom_call.1} parent=31 // pred_fallthru
          _
      $region32: #{tpu_custom_call.1} parent=5 // pred_fallthru
        _
      %p205 = scmp.le.s32.totalorder 1, %s17
      %p206 = scmp.lt.s32.totalorder %s17, 3
      %p207 = pnand %p205, %p206
      %p208 = pneg %p207
      // Predicated region
      $region37: #{tpu_custom_call.1} parent=5 // pred_check
        _
      $region38: #{tpu_custom_call.1} parent=5 // pred_check_branch
        %210 = sbr.rel (%p207) target = $region40
      $region39: #{tpu_custom_call.1} parent=5 // pred_region
        %s211 = ssub.s32 %s17, 1
        %s212 = sand.u32 %s30, 1
        %s213 = scalar_lea.sflag [#allocation6], %s212
        %s214 = sand.u32 %s30, 1
        %s215 = smul.addr %s214, 32
        %s216 = scalar_lea.vmem [#allocation5], %s215
        // Predicated region
        $region41: #{tpu_custom_call.1} parent=39 // pred_check
          %p217 = pneg %p43
        $region42: #{tpu_custom_call.1} parent=39 // pred_check_branch
          %219 = sbr.rel (%p217) target = $region44
        $region43: #{tpu_custom_call.1} parent=39 // pred_region
          %220 = dma.done %s213, 512
        $region44: #{tpu_custom_call.1} parent=39 // pred_fallthru
          _
        %s221 = sand.u32 %s30, 1
        %s222 = scalar_lea.sflag [#allocation6], %s221
        %s223 = sand.u32 %s30, 1
        %s224 = smul.addr %s223, 32
        %s225 = scalar_lea.vmem [#allocation5], %s224
        %p226 = pneg %p43
        %p227 = pneg %p40
        %p228 = pneg %p64
        %p229 = pneg %p61
        %p230 = pneg %p85
        %p231 = pneg %p82
        %p232 = pneg %p106
        %p233 = pneg %p103
        %p234 = pneg %p127
        %p235 = pneg %p124
        %p236 = pneg %p153
        %p237 = pneg %p150
        %s238 = sand.u32 %s140, 1
        %s239 = scalar_lea.sflag [#allocation7], %s238
        %s240 = sand.u32 %s140, 1
        %s241 = smul.addr %s240, 32
        %s242 = scalar_lea.vmem [#allocation8], %s241
        %v244 = vld [vmem:[%s216] sm:$0xff]
        %v245 = vld [vmem:[%s216 + $0x8] sm:$0xff]
        %v246 = vld [vmem:[%s216 + $0x10] sm:$0xff]
        %v247 = vld [vmem:[%s216 + $0x18] sm:$0xff]
        %v248 = vpack.c.bf16 %v246, %v244
        %v249 = vpack.c.bf16 %v247, %v245
        %v250 = vld [vmem:[%s1] sm:$0x3]
        %v251 = vld [vmem:[%s2] sm:$0xf]
        %253 = vset.pattern.permute.xlu0 0
        %254 = vperm.xlu0 %253, %v251
        %v255 = vpop.permute.xlu0 %254
        %vm257 = vcmask 130048
        %v259 = vsel %vm257, %v250, 0
        %261 = vmatprep.subr.bf16.mxu0 0
        %262 = vmatpush1.bf16.msra.mxu0 0
        %263 = vmatprep.subr.bf16.mxu0 0
        %264 = vmatpush1.bf16.msra.mxu0 0
        %265 = vmatprep.subr.bf16.mxu0 0
        %266 = vmatpush1.bf16.msra.mxu0 0
        %267 = vmatprep.subr.bf16.mxu0 0
        %268 = vmatpush1.bf16.msra.mxu0 0
        %269 = vmatprep.subr.bf16.mxu0 0
        %270 = vmatpush1.bf16.msra.mxu0 0
        %271 = vmatprep.subr.bf16.mxu0 0
        %272 = vmatpush1.bf16.msra.mxu0 0
        %273 = vmatprep.subr.bf16.mxu0 0
        %274 = vmatpush1.bf16.msra.mxu0 0
        %275 = vmatprep.subr.bf16.mxu0 %v249
        %276 = vmatpush1.bf16.msra.mxu0 %v248
        %277 = vmatprep.subr.bf16.mxu0 0
        %278 = vmatpush2.bf16.msra.mxu0 0
        %279 = vmatprep.subr.bf16.mxu0 0
        %280 = vmatpush2.bf16.msra.mxu0 0
        %281 = vmatprep.subr.bf16.mxu0 0
        %282 = vmatpush2.bf16.msra.mxu0 0
        %283 = vmatprep.subr.bf16.mxu0 0
        %284 = vmatpush2.bf16.msra.mxu0 0
        %285 = vmatprep.subr.bf16.mxu0 0
        %286 = vmatpush2.bf16.msra.mxu0 0
        %287 = vmatprep.subr.bf16.mxu0 0
        %288 = vmatpush2.bf16.msra.mxu0 0
        %289 = vmatprep.subr.bf16.mxu0 0
        %290 = vmatpush2.bf16.msra.mxu0 0
        %291 = vmatprep.subr.bf16.mxu0 0
        %292 = vmatpush2.bf16.msra.mxu0 0
        %293 = vmatprep.mubr.bf16.mxu0 0
        %294 = vmatmul.mubr.bf16.gmra.mxu0 %v259
        %v295 = vpop.f32.mrf.mxu0
        %v296 = vadd.f32 %v255, %v295
        %v297 = vpop.f32.mrf.mxu0
        %v298 = vadd.f32 %v255, %v297
        %v299 = vpop.f32.mrf.mxu0
        %v300 = vpop.f32.mrf.mxu0
        %301 = vdwg.mxu0
        %v302 = vld [vmem:[%s3] sm:$0xf]
        %v303 = vld [vmem:[%s3 + $0x4] sm:$0xf]
        %v304 = vld [vmem:[%s4] sm:$0xff]
        %v305 = vld [vmem:[%s4 + $0x8] sm:$0xff]
        %307 = vset.pattern.permute.xlu0 0
        %308 = vperm.xlu0 %307, %v304
        %v309 = vpop.permute.xlu0 %308
        %312 = vset.pattern.permute.xlu0 0
        %313 = vperm.xlu0 %312, %v305
        %v314 = vpop.permute.xlu0 %313
        %v318 = vunpack.c.l.b16 %v302
        %v319 = vunpack.c.l.b16 %v303
        %v320 = vpack.c.b16 %v319, %v318
        %v322 = vsel %vm257, %v320, 0
        %324 = vmatprep.subr.bf16.mxu0 0
        %325 = vmatpush1.bf16.msra.mxu0 0
        %326 = vmatprep.subr.bf16.mxu0 0
        %327 = vmatpush1.bf16.msra.mxu0 0
        %328 = vmatprep.subr.bf16.mxu0 0
        %329 = vmatpush1.bf16.msra.mxu0 0
        %330 = vmatprep.subr.bf16.mxu0 0
        %331 = vmatpush1.bf16.msra.mxu0 0
        %332 = vmatprep.subr.bf16.mxu0 0
        %333 = vmatpush1.bf16.msra.mxu0 0
        %334 = vmatprep.subr.bf16.mxu0 0
        %335 = vmatpush1.bf16.msra.mxu0 0
        %336 = vmatprep.subr.bf16.mxu0 0
        %337 = vmatpush1.bf16.msra.mxu0 0
        %338 = vmatprep.subr.bf16.mxu0 %v249
        %339 = vmatpush1.bf16.msra.mxu0 %v248
        %340 = vmatprep.subr.bf16.mxu0 0
        %341 = vmatpush2.bf16.msra.mxu0 0
        %342 = vmatprep.subr.bf16.mxu0 0
        %343 = vmatpush2.bf16.msra.mxu0 0
        %344 = vmatprep.subr.bf16.mxu0 0
        %345 = vmatpush2.bf16.msra.mxu0 0
        %346 = vmatprep.subr.bf16.mxu0 0
        %347 = vmatpush2.bf16.msra.mxu0 0
        %348 = vmatprep.subr.bf16.mxu0 0
        %349 = vmatpush2.bf16.msra.mxu0 0
        %350 = vmatprep.subr.bf16.mxu0 0
        %351 = vmatpush2.bf16.msra.mxu0 0
        %352 = vmatprep.subr.bf16.mxu0 0
        %353 = vmatpush2.bf16.msra.mxu0 0
        %354 = vmatprep.subr.bf16.mxu0 0
        %355 = vmatpush2.bf16.msra.mxu0 0
        %356 = vmatprep.mubr.bf16.mxu0 0
        %357 = vmatmul.mubr.bf16.gmra.mxu0 %v322
        %v358 = vpop.f32.mrf.mxu0
        %v359 = vadd.f32 %v309, %v358
        %v360 = vpop.f32.mrf.mxu0
        %v361 = vadd.f32 %v309, %v360
        %v362 = vpop.f32.mrf.mxu0
        %v363 = vadd.f32 %v314, %v362
        %v364 = vpop.f32.mrf.mxu0
        %v365 = vadd.f32 %v314, %v364
        %366 = vdwg.mxu0
        %v367 = vpack.c.bf16 %v296, %v296
        %v368 = vpack.c.bf16 %v298, %v298
        %v371 = vcombine.low %v367, %v368
        %v373 = vunpack.c.l.s4 1966171168
        %v374 = vunpack.c.0.s8 %v373
        %v375 = vlaneseq
        %v376 = vshrl.u32 %v375, 7
        %v377 = vsub.s32 %v374, %v376
        %v378 = vrot.slane %v371, %v377
        %v380 = vunpack.c.l.s4 1966171168
        %v381 = vunpack.c.0.s8 %v380
        %v382 = vlaneseq
        %v383 = vshrl.u32 %v382, 7
        %v384 = vsub.s32 %v381, %v383
        %v385 = vrot.slane %v378, %v384
        %387 = vst [vmem:[#allocation2] sm:$0x3] %v385
        %v388 = vpack.c.bf16 %v363, %v359
        %v389 = vpack.c.bf16 %v365, %v361
        %v392 = vunpack.c.l.b16 %v388
        %v393 = vunpack.c.l.b16 %v389
        %v394 = vunpack.c.h.b16 %v388
        %v395 = vunpack.c.h.b16 %v389
        %v396 = vpack.c.b16 %v393, %v392
        %v397 = vpack.c.b16 %v395, %v394
        %400 = vst [vmem:[#allocation3] sm:$0xff] %v396
        %401 = vst [vmem:[#allocation3 + $0x8] sm:$0xff] %v397
        %402 = vst [vmem:[#allocation4] sm:$0xff] 0.0
        %403 = vst [vmem:[#allocation4 + $0x8] sm:$0xff] 0.0
        %404 = vst [vmem:[#allocation4 + $0x10] sm:$0xff] 0.0
        %405 = vst [vmem:[#allocation4 + $0x18] sm:$0xff] 0.0
        %v406 = vld [vmem:[#allocation2] sm:$0x3]
        %v407 = vld [vmem:[#allocation3] sm:$0xff]
        %v408 = vld [vmem:[#allocation3 + $0x8] sm:$0xff]
        %v411 = vunpack.c.l.s4 1966171168
        %v412 = vunpack.c.0.s8 %v411
        %v413 = vlaneseq
        %v414 = vshrl.u32 %v413, 7
        %v415 = vsub.s32 %v412, %v414
        %v416 = vrot.slane %v406, %v415
        %v417 = vcombine.high %v416, %v416
        %v419 = vunpack.c.l.s4 1966171168
        %v420 = vunpack.c.0.s8 %v419
        %v421 = vlaneseq
        %v422 = vshrl.u32 %v421, 7
        %v423 = vsub.s32 %v420, %v422
        %v424 = vrot.slane %v416, %v423
        %v426 = vunpack.c.l.s4 1966171168
        %v427 = vunpack.c.0.s8 %v426
        %v428 = vlaneseq
        %v429 = vshrl.u32 %v428, 7
        %v430 = vsub.s32 %v427, %v429
        %v431 = vrot.slane %v417, %v430
        %434 = vxpose.xlu0.c.b16.start [1/8] %v424, 128
        %435 = vxpose.xlu0.c.b16.cont [2/8] 0, 128
        %436 = vxpose.xlu0.c.b16.cont [3/8] 0, 128
        %437 = vxpose.xlu0.c.b16.cont [4/8] 0, 128
        %438 = vxpose.xlu0.c.b16.cont [5/8] 0, 128
        %439 = vxpose.xlu0.c.b16.cont [6/8] 0, 128
        %440 = vxpose.xlu0.c.b16.cont [7/8] 0, 128
        %441 = vxpose.xlu0.c.b16.end [8/8] 0, 128
        %v442 = vpop.trf.xlu0
        %v443 = vpop.trf.xlu0
        %v444 = vpop.trf.xlu0
        %v445 = vpop.trf.xlu0
        %v446 = vpop.trf.xlu0
        %v447 = vpop.trf.xlu0
        %v448 = vpop.trf.xlu0
        %v449 = vpop.trf.xlu0
        %450 = vxpose.xlu0.c.b16.start [1/8] %v431, 128
        %451 = vxpose.xlu0.c.b16.cont [2/8] 0, 128
        %452 = vxpose.xlu0.c.b16.cont [3/8] 0, 128
        %453 = vxpose.xlu0.c.b16.cont [4/8] 0, 128
        %454 = vxpose.xlu0.c.b16.cont [5/8] 0, 128
        %455 = vxpose.xlu0.c.b16.cont [6/8] 0, 128
        %456 = vxpose.xlu0.c.b16.cont [7/8] 0, 128
        %457 = vxpose.xlu0.c.b16.end [8/8] 0, 128
        %v458 = vpop.trf.xlu0
        %v459 = vpop.trf.xlu0
        %v460 = vpop.trf.xlu0
        %v461 = vpop.trf.xlu0
        %v462 = vpop.trf.xlu0
        %v463 = vpop.trf.xlu0
        %v464 = vpop.trf.xlu0
        %v465 = vpop.trf.xlu0
        %v466 = vrot.slane %v367, 1
        %v467 = vrot.slane %v368, 1
        %vm468 = vcmask 15360
        %v470 = vsel %vm468, %v442, 0
        %v473 = vsel %vm468, %v443, 0
        %v476 = vsel %vm468, %v444, 0
        %v479 = vsel %vm468, %v445, 0
        %v482 = vsel %vm468, %v446, 0
        %v485 = vsel %vm468, %v447, 0
        %v488 = vsel %vm468, %v448, 0
        %v491 = vsel %vm468, %v449, 0
        %v494 = vsel %vm468, %v458, 0
        %v497 = vsel %vm468, %v459, 0
        %v500 = vsel %vm468, %v460, 0
        %v503 = vsel %vm468, %v461, 0
        %v506 = vsel %vm468, %v462, 0
        %v509 = vsel %vm468, %v463, 0
        %v512 = vsel %vm468, %v464, 0
        %v515 = vsel %vm468, %v465, 0
        %vm517 = vcmask 1040384
        %v519 = vsel %vm517, %v466, 0
        %v522 = vsel %vm517, %v467, 0
        %524 = vmatprep.subr.bf16.mxu0 0
        %525 = vmatpush1.bf16.msra.mxu0 0
        %526 = vmatprep.subr.bf16.mxu0 0
        %527 = vmatpush1.bf16.msra.mxu0 0
        %528 = vmatprep.subr.bf16.mxu0 0
        %529 = vmatpush1.bf16.msra.mxu0 0
        %530 = vmatprep.subr.bf16.mxu0 0
        %531 = vmatpush1.bf16.msra.mxu0 0
        %532 = vmatprep.subr.bf16.mxu0 0
        %533 = vmatpush1.bf16.msra.mxu0 0
        %534 = vmatprep.subr.bf16.mxu0 0
        %535 = vmatpush1.bf16.msra.mxu0 0
        %536 = vmatprep.subr.bf16.mxu0 0
        %537 = vmatpush1.bf16.msra.mxu0 0
        %538 = vmatprep.subr.bf16.mxu0 %v522
        %539 = vmatpush1.bf16.msra.mxu0 %v519
        %540 = vmatprep.subr.bf16.mxu0 0
        %541 = vmatpush2.bf16.msra.mxu0 0
        %542 = vmatprep.subr.bf16.mxu0 0
        %543 = vmatpush2.bf16.msra.mxu0 0
        %544 = vmatprep.subr.bf16.mxu0 0
        %545 = vmatpush2.bf16.msra.mxu0 0
        %546 = vmatprep.subr.bf16.mxu0 0
        %547 = vmatpush2.bf16.msra.mxu0 0
        %548 = vmatprep.subr.bf16.mxu0 0
        %549 = vmatpush2.bf16.msra.mxu0 0
        %550 = vmatprep.subr.bf16.mxu0 0
        %551 = vmatpush2.bf16.msra.mxu0 0
        %552 = vmatprep.subr.bf16.mxu0 0
        %553 = vmatpush2.bf16.msra.mxu0 0
        %554 = vmatprep.subr.bf16.mxu0 0
        %555 = vmatpush2.bf16.msra.mxu0 0
        %556 = vmatprep.mubr.bf16.mxu0 0
        %557 = vmatmul.mubr.bf16.gmra.mxu0 %v470
        %v558 = vpop.f32.mrf.mxu0
        %v559 = vadd.f32 0.0, %v558
        %v560 = vpop.f32.mrf.mxu0
        %v561 = vadd.f32 0.0, %v560
        %v562 = vpop.f32.mrf.mxu0
        %v563 = vadd.f32 0.0, %v562
        %v564 = vpop.f32.mrf.mxu0
        %v565 = vadd.f32 0.0, %v564
        %566 = vmatprep.mubr.bf16.mxu0 0
        %567 = vmatmul.mubr.bf16.gmra.mxu0 %v473
        %v568 = vpop.f32.mrf.mxu0
        %v569 = vadd.f32 0.0, %v568
        %v570 = vpop.f32.mrf.mxu0
        %v571 = vadd.f32 0.0, %v570
        %v572 = vpop.f32.mrf.mxu0
        %v573 = vadd.f32 0.0, %v572
        %v574 = vpop.f32.mrf.mxu0
        %v575 = vadd.f32 0.0, %v574
        %576 = vmatprep.mubr.bf16.mxu0 0
        %577 = vmatmul.mubr.bf16.gmra.mxu0 %v476
        %v578 = vpop.f32.mrf.mxu0
        %v579 = vadd.f32 0.0, %v578
        %v580 = vpop.f32.mrf.mxu0
        %v581 = vadd.f32 0.0, %v580
        %v582 = vpop.f32.mrf.mxu0
        %v583 = vadd.f32 0.0, %v582
        %v584 = vpop.f32.mrf.mxu0
        %v585 = vadd.f32 0.0, %v584
        %586 = vmatprep.mubr.bf16.mxu0 0
        %587 = vmatmul.mubr.bf16.gmra.mxu0 %v479
        %v588 = vpop.f32.mrf.mxu0
        %v589 = vadd.f32 0.0, %v588
        %v590 = vpop.f32.mrf.mxu0
        %v591 = vadd.f32 0.0, %v590
        %v592 = vpop.f32.mrf.mxu0
        %v593 = vadd.f32 0.0, %v592
        %v594 = vpop.f32.mrf.mxu0
        %v595 = vadd.f32 0.0, %v594
        %596 = vmatprep.mubr.bf16.mxu0 0
        %597 = vmatmul.mubr.bf16.gmra.mxu0 %v482
        %v598 = vpop.f32.mrf.mxu0
        %v599 = vadd.f32 0.0, %v598
        %v600 = vpop.f32.mrf.mxu0
        %v601 = vadd.f32 0.0, %v600
        %v602 = vpop.f32.mrf.mxu0
        %v603 = vadd.f32 0.0, %v602
        %v604 = vpop.f32.mrf.mxu0
        %v605 = vadd.f32 0.0, %v604
        %606 = vmatprep.mubr.bf16.mxu0 0
        %607 = vmatmul.mubr.bf16.gmra.mxu0 %v485
        %v608 = vpop.f32.mrf.mxu0
        %v609 = vadd.f32 0.0, %v608
        %v610 = vpop.f32.mrf.mxu0
        %v611 = vadd.f32 0.0, %v610
        %v612 = vpop.f32.mrf.mxu0
        %v613 = vadd.f32 0.0, %v612
        %v614 = vpop.f32.mrf.mxu0
        %v615 = vadd.f32 0.0, %v614
        %616 = vmatprep.mubr.bf16.mxu0 0
        %617 = vmatmul.mubr.bf16.gmra.mxu0 %v488
        %v618 = vpop.f32.mrf.mxu0
        %v619 = vadd.f32 0.0, %v618
        %v620 = vpop.f32.mrf.mxu0
        %v621 = vadd.f32 0.0, %v620
        %v622 = vpop.f32.mrf.mxu0
        %v623 = vadd.f32 0.0, %v622
        %v624 = vpop.f32.mrf.mxu0
        %v625 = vadd.f32 0.0, %v624
        %626 = vmatprep.mubr.bf16.mxu0 0
        %627 = vmatmul.mubr.bf16.gmra.mxu0 %v491
        %v628 = vpop.f32.mrf.mxu0
        %v629 = vadd.f32 0.0, %v628
        %v630 = vpop.f32.mrf.mxu0
        %v631 = vadd.f32 0.0, %v630
        %v632 = vpop.f32.mrf.mxu0
        %v633 = vadd.f32 0.0, %v632
        %v634 = vpop.f32.mrf.mxu0
        %v635 = vadd.f32 0.0, %v634
        %636 = vmatprep.mubr.bf16.mxu0 0
        %637 = vmatmul.mubr.bf16.gmra.mxu0 %v494
        %v638 = vpop.f32.mrf.mxu0
        %v639 = vadd.f32 0.0, %v638
        %v640 = vpop.f32.mrf.mxu0
        %v641 = vadd.f32 0.0, %v640
        %v642 = vpop.f32.mrf.mxu0
        %v643 = vadd.f32 0.0, %v642
        %v644 = vpop.f32.mrf.mxu0
        %v645 = vadd.f32 0.0, %v644
        %646 = vmatprep.mubr.bf16.mxu0 0
        %647 = vmatmul.mubr.bf16.gmra.mxu0 %v497
        %v648 = vpop.f32.mrf.mxu0
        %v649 = vadd.f32 0.0, %v648
        %v650 = vpop.f32.mrf.mxu0
        %v651 = vadd.f32 0.0, %v650
        %v652 = vpop.f32.mrf.mxu0
        %v653 = vadd.f32 0.0, %v652
        %v654 = vpop.f32.mrf.mxu0
        %v655 = vadd.f32 0.0, %v654
        %656 = vmatprep.mubr.bf16.mxu0 0
        %657 = vmatmul.mubr.bf16.gmra.mxu0 %v500
        %v658 = vpop.f32.mrf.mxu0
        %v659 = vadd.f32 0.0, %v658
        %v660 = vpop.f32.mrf.mxu0
        %v661 = vadd.f32 0.0, %v660
        %v662 = vpop.f32.mrf.mxu0
        %v663 = vadd.f32 0.0, %v662
        %v664 = vpop.f32.mrf.mxu0
        %v665 = vadd.f32 0.0, %v664
        %666 = vmatprep.mubr.bf16.mxu0 0
        %667 = vmatmul.mubr.bf16.gmra.mxu0 %v503
        %v668 = vpop.f32.mrf.mxu0
        %v669 = vadd.f32 0.0, %v668
        %v670 = vpop.f32.mrf.mxu0
        %v671 = vadd.f32 0.0, %v670
        %v672 = vpop.f32.mrf.mxu0
        %v673 = vadd.f32 0.0, %v672
        %v674 = vpop.f32.mrf.mxu0
        %v675 = vadd.f32 0.0, %v674
        %676 = vmatprep.mubr.bf16.mxu0 0
        %677 = vmatmul.mubr.bf16.gmra.mxu0 %v506
        %v678 = vpop.f32.mrf.mxu0
        %v679 = vadd.f32 0.0, %v678
        %v680 = vpop.f32.mrf.mxu0
        %v681 = vadd.f32 0.0, %v680
        %v682 = vpop.f32.mrf.mxu0
        %v683 = vadd.f32 0.0, %v682
        %v684 = vpop.f32.mrf.mxu0
        %v685 = vadd.f32 0.0, %v684
        %686 = vmatprep.mubr.bf16.mxu0 0
        %687 = vmatmul.mubr.bf16.gmra.mxu0 %v509
        %v688 = vpop.f32.mrf.mxu0
        %v689 = vadd.f32 0.0, %v688
        %v690 = vpop.f32.mrf.mxu0
        %v691 = vadd.f32 0.0, %v690
        %v692 = vpop.f32.mrf.mxu0
        %v693 = vadd.f32 0.0, %v692
        %v694 = vpop.f32.mrf.mxu0
        %v695 = vadd.f32 0.0, %v694
        %696 = vmatprep.mubr.bf16.mxu0 0
        %697 = vmatmul.mubr.bf16.gmra.mxu0 %v512
        %v698 = vpop.f32.mrf.mxu0
        %v699 = vadd.f32 0.0, %v698
        %v700 = vpop.f32.mrf.mxu0
        %v701 = vadd.f32 0.0, %v700
        %v702 = vpop.f32.mrf.mxu0
        %v703 = vadd.f32 0.0, %v702
        %v704 = vpop.f32.mrf.mxu0
        %v705 = vadd.f32 0.0, %v704
        %706 = vmatprep.mubr.bf16.mxu0 0
        %707 = vmatmul.mubr.bf16.gmra.mxu0 %v515
        %v708 = vpop.f32.mrf.mxu0
        %v709 = vadd.f32 0.0, %v708
        %v710 = vpop.f32.mrf.mxu0
        %v711 = vadd.f32 0.0, %v710
        %v712 = vpop.f32.mrf.mxu0
        %v713 = vadd.f32 0.0, %v712
        %v714 = vpop.f32.mrf.mxu0
        %v715 = vadd.f32 0.0, %v714
        %716 = vdwg.mxu0
        %v717 = vmax.f32 %v559, %v561
        %718 = vmax.xlane.f32.xlu0 %v717
        %v719 = vpop.xlane.xlu0 %718
        %v720 = vmax.f32 %v563, %v565
        %721 = vmax.xlane.f32.xlu0 %v720
        %v722 = vpop.xlane.xlu0 %721
        %v723 = vmax.f32 %v569, %v571
        %724 = vmax.xlane.f32.xlu0 %v723
        %v725 = vpop.xlane.xlu0 %724
        %v726 = vmax.f32 %v573, %v575
        %727 = vmax.xlane.f32.xlu0 %v726
        %v728 = vpop.xlane.xlu0 %727
        %v729 = vmax.f32 %v579, %v581
        %730 = vmax.xlane.f32.xlu0 %v729
        %v731 = vpop.xlane.xlu0 %730
        %v732 = vmax.f32 %v583, %v585
        %733 = vmax.xlane.f32.xlu0 %v732
        %v734 = vpop.xlane.xlu0 %733
        %v735 = vmax.f32 %v589, %v591
        %736 = vmax.xlane.f32.xlu0 %v735
        %v737 = vpop.xlane.xlu0 %736
        %v738 = vmax.f32 %v593, %v595
        %739 = vmax.xlane.f32.xlu0 %v738
        %v740 = vpop.xlane.xlu0 %739
        %v741 = vmax.f32 %v599, %v601
        %742 = vmax.xlane.f32.xlu0 %v741
        %v743 = vpop.xlane.xlu0 %742
        %v744 = vmax.f32 %v603, %v605
        %745 = vmax.xlane.f32.xlu0 %v744
        %v746 = vpop.xlane.xlu0 %745
        %v747 = vmax.f32 %v609, %v611
        %748 = vmax.xlane.f32.xlu0 %v747
        %v749 = vpop.xlane.xlu0 %748
        %v750 = vmax.f32 %v613, %v615
        %751 = vmax.xlane.f32.xlu0 %v750
        %v752 = vpop.xlane.xlu0 %751
        %v753 = vmax.f32 %v619, %v621
        %754 = vmax.xlane.f32.xlu0 %v753
        %v755 = vpop.xlane.xlu0 %754
        %v756 = vmax.f32 %v623, %v625
        %757 = vmax.xlane.f32.xlu0 %v756
        %v758 = vpop.xlane.xlu0 %757
        %v759 = vmax.f32 %v629, %v631
        %760 = vmax.xlane.f32.xlu0 %v759
        %v761 = vpop.xlane.xlu0 %760
        %v762 = vmax.f32 %v633, %v635
        %763 = vmax.xlane.f32.xlu0 %v762
        %v764 = vpop.xlane.xlu0 %763
        %v765 = vmax.f32 %v639, %v641
        %766 = vmax.xlane.f32.xlu0 %v765
        %v767 = vpop.xlane.xlu0 %766
        %v768 = vmax.f32 %v643, %v645
        %769 = vmax.xlane.f32.xlu0 %v768
        %v770 = vpop.xlane.xlu0 %769
        %v771 = vmax.f32 %v649, %v651
        %772 = vmax.xlane.f32.xlu0 %v771
        %v773 = vpop.xlane.xlu0 %772
        %v774 = vmax.f32 %v653, %v655
        %775 = vmax.xlane.f32.xlu0 %v774
        %v776 = vpop.xlane.xlu0 %775
        %v777 = vmax.f32 %v659, %v661
        %778 = vmax.xlane.f32.xlu0 %v777
        %v779 = vpop.xlane.xlu0 %778
        %v780 = vmax.f32 %v663, %v665
        %781 = vmax.xlane.f32.xlu0 %v780
        %v782 = vpop.xlane.xlu0 %781
        %v783 = vmax.f32 %v669, %v671
        %784 = vmax.xlane.f32.xlu0 %v783
        %v785 = vpop.xlane.xlu0 %784
        %v786 = vmax.f32 %v673, %v675
        %787 = vmax.xlane.f32.xlu0 %v786
        %v788 = vpop.xlane.xlu0 %787
        %v789 = vmax.f32 %v679, %v681
        %790 = vmax.xlane.f32.xlu0 %v789
        %v791 = vpop.xlane.xlu0 %790
        %v792 = vmax.f32 %v683, %v685
        %793 = vmax.xlane.f32.xlu0 %v792
        %v794 = vpop.xlane.xlu0 %793
        %v795 = vmax.f32 %v689, %v691
        %796 = vmax.xlane.f32.xlu0 %v795
        %v797 = vpop.xlane.xlu0 %796
        %v798 = vmax.f32 %v693, %v695
        %799 = vmax.xlane.f32.xlu0 %v798
        %v800 = vpop.xlane.xlu0 %799
        %v801 = vmax.f32 %v699, %v701
        %802 = vmax.xlane.f32.xlu0 %v801
        %v803 = vpop.xlane.xlu0 %802
        %v804 = vmax.f32 %v703, %v705
        %805 = vmax.xlane.f32.xlu0 %v804
        %v806 = vpop.xlane.xlu0 %805
        %v807 = vmax.f32 %v709, %v711
        %808 = vmax.xlane.f32.xlu0 %v807
        %v809 = vpop.xlane.xlu0 %808
        %v810 = vmax.f32 %v713, %v715
        %811 = vmax.xlane.f32.xlu0 %v810
        %v812 = vpop.xlane.xlu0 %811
        %v813 = vsub.f32 %v559, %v719
        %v814 = vsub.f32 %v561, %v719
        %v815 = vsub.f32 %v563, %v722
        %v816 = vsub.f32 %v565, %v722
        %v817 = vsub.f32 %v569, %v725
        %v818 = vsub.f32 %v571, %v725
        %v819 = vsub.f32 %v573, %v728
        %v820 = vsub.f32 %v575, %v728
        %v821 = vsub.f32 %v579, %v731
        %v822 = vsub.f32 %v581, %v731
        %v823 = vsub.f32 %v583, %v734
        %v824 = vsub.f32 %v585, %v734
        %v825 = vsub.f32 %v589, %v737
        %v826 = vsub.f32 %v591, %v737
        %v827 = vsub.f32 %v593, %v740
        %v828 = vsub.f32 %v595, %v740
        %v829 = vsub.f32 %v599, %v743
        %v830 = vsub.f32 %v601, %v743
        %v831 = vsub.f32 %v603, %v746
        %v832 = vsub.f32 %v605, %v746
        %v833 = vsub.f32 %v609, %v749
        %v834 = vsub.f32 %v611, %v749
        %v835 = vsub.f32 %v613, %v752
        %v836 = vsub.f32 %v615, %v752
        %v837 = vsub.f32 %v619, %v755
        %v838 = vsub.f32 %v621, %v755
        %v839 = vsub.f32 %v623, %v758
        %v840 = vsub.f32 %v625, %v758
        %v841 = vsub.f32 %v629, %v761
        %v842 = vsub.f32 %v631, %v761
        %v843 = vsub.f32 %v633, %v764
        %v844 = vsub.f32 %v635, %v764
        %v845 = vsub.f32 %v639, %v767
        %v846 = vsub.f32 %v641, %v767
        %v847 = vsub.f32 %v643, %v770
        %v848 = vsub.f32 %v645, %v770
        %v849 = vsub.f32 %v649, %v773
        %v850 = vsub.f32 %v651, %v773
        %v851 = vsub.f32 %v653, %v776
        %v852 = vsub.f32 %v655, %v776
        %v853 = vsub.f32 %v659, %v779
        %v854 = vsub.f32 %v661, %v779
        %v855 = vsub.f32 %v663, %v782
        %v856 = vsub.f32 %v665, %v782
        %v857 = vsub.f32 %v669, %v785
        %v858 = vsub.f32 %v671, %v785
        %v859 = vsub.f32 %v673, %v788
        %v860 = vsub.f32 %v675, %v788
        %v861 = vsub.f32 %v679, %v791
        %v862 = vsub.f32 %v681, %v791
        %v863 = vsub.f32 %v683, %v794
        %v864 = vsub.f32 %v685, %v794
        %v865 = vsub.f32 %v689, %v797
        %v866 = vsub.f32 %v691, %v797
        %v867 = vsub.f32 %v693, %v800
        %v868 = vsub.f32 %v695, %v800
        %v869 = vsub.f32 %v699, %v803
        %v870 = vsub.f32 %v701, %v803
        %v871 = vsub.f32 %v703, %v806
        %v872 = vsub.f32 %v705, %v806
        %v873 = vsub.f32 %v709, %v809
        %v874 = vsub.f32 %v711, %v809
        %v875 = vsub.f32 %v713, %v812
        %v876 = vsub.f32 %v715, %v812
        %v877 = vmul.f32 %v813, 1.442695
        %v878 = vpow.pop %v877
        %v879 = vmul.f32 %v814, 1.442695
        %v880 = vpow.pop %v879
        %v881 = vmul.f32 %v815, 1.442695
        %v882 = vpow.pop %v881
        %v883 = vmul.f32 %v816, 1.442695
        %v884 = vpow.pop %v883
        %v885 = vmul.f32 %v817, 1.442695
        %v886 = vpow.pop %v885
        %v887 = vmul.f32 %v818, 1.442695
        %v888 = vpow.pop %v887
        %v889 = vmul.f32 %v819, 1.442695
        %v890 = vpow.pop %v889
        %v891 = vmul.f32 %v820, 1.442695
        %v892 = vpow.pop %v891
        %v893 = vmul.f32 %v821, 1.442695
        %v894 = vpow.pop %v893
        %v895 = vmul.f32 %v822, 1.442695
        %v896 = vpow.pop %v895
        %v897 = vmul.f32 %v823, 1.442695
        %v898 = vpow.pop %v897
        %v899 = vmul.f32 %v824, 1.442695
        %v900 = vpow.pop %v899
        %v901 = vmul.f32 %v825, 1.442695
        %v902 = vpow.pop %v901
        %v903 = vmul.f32 %v826, 1.442695
        %v904 = vpow.pop %v903
        %v905 = vmul.f32 %v827, 1.442695
        %v906 = vpow.pop %v905
        %v907 = vmul.f32 %v828, 1.442695
        %v908 = vpow.pop %v907
        %v909 = vmul.f32 %v829, 1.442695
        %v910 = vpow.pop %v909
        %v911 = vmul.f32 %v830, 1.442695
        %v912 = vpow.pop %v911
        %v913 = vmul.f32 %v831, 1.442695
        %v914 = vpow.pop %v913
        %v915 = vmul.f32 %v832, 1.442695
        %v916 = vpow.pop %v915
        %v917 = vmul.f32 %v833, 1.442695
        %v918 = vpow.pop %v917
        %v919 = vmul.f32 %v834, 1.442695
        %v920 = vpow.pop %v919
        %v921 = vmul.f32 %v835, 1.442695
        %v922 = vpow.pop %v921
        %v923 = vmul.f32 %v836, 1.442695
        %v924 = vpow.pop %v923
        %v925 = vmul.f32 %v837, 1.442695
        %v926 = vpow.pop %v925
        %v927 = vmul.f32 %v838, 1.442695
        %v928 = vpow.pop %v927
        %v929 = vmul.f32 %v839, 1.442695
        %v930 = vpow.pop %v929
        %v931 = vmul.f32 %v840, 1.442695
        %v932 = vpow.pop %v931
        %v933 = vmul.f32 %v841, 1.442695
        %v934 = vpow.pop %v933
        %v935 = vmul.f32 %v842, 1.442695
        %v936 = vpow.pop %v935
        %v937 = vmul.f32 %v843, 1.442695
        %v938 = vpow.pop %v937
        %v939 = vmul.f32 %v844, 1.442695
        %v940 = vpow.pop %v939
        %v941 = vmul.f32 %v845, 1.442695
        %v942 = vpow.pop %v941
        %v943 = vmul.f32 %v846, 1.442695
        %v944 = vpow.pop %v943
        %v945 = vmul.f32 %v847, 1.442695
        %v946 = vpow.pop %v945
        %v947 = vmul.f32 %v848, 1.442695
        %v948 = vpow.pop %v947
        %v949 = vmul.f32 %v849, 1.442695
        %v950 = vpow.pop %v949
        %v951 = vmul.f32 %v850, 1.442695
        %v952 = vpow.pop %v951
        %v953 = vmul.f32 %v851, 1.442695
        %v954 = vpow.pop %v953
        %v955 = vmul.f32 %v852, 1.442695
        %v956 = vpow.pop %v955
        %v957 = vmul.f32 %v853, 1.442695
        %v958 = vpow.pop %v957
        %v959 = vmul.f32 %v854, 1.442695
        %v960 = vpow.pop %v959
        %v961 = vmul.f32 %v855, 1.442695
        %v962 = vpow.pop %v961
        %v963 = vmul.f32 %v856, 1.442695
        %v964 = vpow.pop %v963
        %v965 = vmul.f32 %v857, 1.442695
        %v966 = vpow.pop %v965
        %v967 = vmul.f32 %v858, 1.442695
        %v968 = vpow.pop %v967
        %v969 = vmul.f32 %v859, 1.442695
        %v970 = vpow.pop %v969
        %v971 = vmul.f32 %v860, 1.442695
        %v972 = vpow.pop %v971
        %v973 = vmul.f32 %v861, 1.442695
        %v974 = vpow.pop %v973
        %v975 = vmul.f32 %v862, 1.442695
        %v976 = vpow.pop %v975
        %v977 = vmul.f32 %v863, 1.442695
        %v978 = vpow.pop %v977
        %v979 = vmul.f32 %v864, 1.442695
        %v980 = vpow.pop %v979
        %v981 = vmul.f32 %v865, 1.442695
        %v982 = vpow.pop %v981
        %v983 = vmul.f32 %v866, 1.442695
        %v984 = vpow.pop %v983
        %v985 = vmul.f32 %v867, 1.442695
        %v986 = vpow.pop %v985
        %v987 = vmul.f32 %v868, 1.442695
        %v988 = vpow.pop %v987
        %v989 = vmul.f32 %v869, 1.442695
        %v990 = vpow.pop %v989
        %v991 = vmul.f32 %v870, 1.442695
        %v992 = vpow.pop %v991
        %v993 = vmul.f32 %v871, 1.442695
        %v994 = vpow.pop %v993
        %v995 = vmul.f32 %v872, 1.442695
        %v996 = vpow.pop %v995
        %v997 = vmul.f32 %v873, 1.442695
        %v998 = vpow.pop %v997
        %v999 = vmul.f32 %v874, 1.442695
        %v1000 = vpow.pop %v999
        %v1001 = vmul.f32 %v875, 1.442695
        %v1002 = vpow.pop %v1001
        %v1003 = vmul.f32 %v876, 1.442695
        %v1004 = vpow.pop %v1003
        %v1005 = vadd.f32 %v878, %v880
        %1006 = vadd.xlane.f32.xlu0 %v1005
        %v1007 = vpop.xlane.xlu0 %1006
        %v1008 = vadd.f32 %v882, %v884
        %1009 = vadd.xlane.f32.xlu0 %v1008
        %v1010 = vpop.xlane.xlu0 %1009
        %v1011 = vadd.f32 %v886, %v888
        %1012 = vadd.xlane.f32.xlu0 %v1011
        %v1013 = vpop.xlane.xlu0 %1012
        %v1014 = vadd.f32 %v890, %v892
        %1015 = vadd.xlane.f32.xlu0 %v1014
        %v1016 = vpop.xlane.xlu0 %1015
        %v1017 = vadd.f32 %v894, %v896
        %1018 = vadd.xlane.f32.xlu0 %v1017
        %v1019 = vpop.xlane.xlu0 %1018
        %v1020 = vadd.f32 %v898, %v900
        %1021 = vadd.xlane.f32.xlu0 %v1020
        %v1022 = vpop.xlane.xlu0 %1021
        %v1023 = vadd.f32 %v902, %v904
        %1024 = vadd.xlane.f32.xlu0 %v1023
        %v1025 = vpop.xlane.xlu0 %1024
        %v1026 = vadd.f32 %v906, %v908
        %1027 = vadd.xlane.f32.xlu0 %v1026
        %v1028 = vpop.xlane.xlu0 %1027
        %v1029 = vadd.f32 %v910, %v912
        %1030 = vadd.xlane.f32.xlu0 %v1029
        %v1031 = vpop.xlane.xlu0 %1030
        %v1032 = vadd.f32 %v914, %v916
        %1033 = vadd.xlane.f32.xlu0 %v1032
        %v1034 = vpop.xlane.xlu0 %1033
        %v1035 = vadd.f32 %v918, %v920
        %1036 = vadd.xlane.f32.xlu0 %v1035
        %v1037 = vpop.xlane.xlu0 %1036
        %v1038 = vadd.f32 %v922, %v924
        %1039 = vadd.xlane.f32.xlu0 %v1038
        %v1040 = vpop.xlane.xlu0 %1039
        %v1041 = vadd.f32 %v926, %v928
        %1042 = vadd.xlane.f32.xlu0 %v1041
        %v1043 = vpop.xlane.xlu0 %1042
        %v1044 = vadd.f32 %v930, %v932
        %1045 = vadd.xlane.f32.xlu0 %v1044
        %v1046 = vpop.xlane.xlu0 %1045
        %v1047 = vadd.f32 %v934, %v936
        %1048 = vadd.xlane.f32.xlu0 %v1047
        %v1049 = vpop.xlane.xlu0 %1048
        %v1050 = vadd.f32 %v938, %v940
        %1051 = vadd.xlane.f32.xlu0 %v1050
        %v1052 = vpop.xlane.xlu0 %1051
        %v1053 = vadd.f32 %v942, %v944
        %1054 = vadd.xlane.f32.xlu0 %v1053
        %v1055 = vpop.xlane.xlu0 %1054
        %v1056 = vadd.f32 %v946, %v948
        %1057 = vadd.xlane.f32.xlu0 %v1056
        %v1058 = vpop.xlane.xlu0 %1057
        %v1059 = vadd.f32 %v950, %v952
        %1060 = vadd.xlane.f32.xlu0 %v1059
        %v1061 = vpop.xlane.xlu0 %1060
        %v1062 = vadd.f32 %v954, %v956
        %1063 = vadd.xlane.f32.xlu0 %v1062
        %v1064 = vpop.xlane.xlu0 %1063
        %v1065 = vadd.f32 %v958, %v960
        %1066 = vadd.xlane.f32.xlu0 %v1065
        %v1067 = vpop.xlane.xlu0 %1066
        %v1068 = vadd.f32 %v962, %v964
        %1069 = vadd.xlane.f32.xlu0 %v1068
        %v1070 = vpop.xlane.xlu0 %1069
        %v1071 = vadd.f32 %v966, %v968
        %1072 = vadd.xlane.f32.xlu0 %v1071
        %v1073 = vpop.xlane.xlu0 %1072
        %v1074 = vadd.f32 %v970, %v972
        %1075 = vadd.xlane.f32.xlu0 %v1074
        %v1076 = vpop.xlane.xlu0 %1075
        %v1077 = vadd.f32 %v974, %v976
        %1078 = vadd.xlane.f32.xlu0 %v1077
        %v1079 = vpop.xlane.xlu0 %1078
        %v1080 = vadd.f32 %v978, %v980
        %1081 = vadd.xlane.f32.xlu0 %v1080
        %v1082 = vpop.xlane.xlu0 %1081
        %v1083 = vadd.f32 %v982, %v984
        %1084 = vadd.xlane.f32.xlu0 %v1083
        %v1085 = vpop.xlane.xlu0 %1084
        %v1086 = vadd.f32 %v986, %v988
        %1087 = vadd.xlane.f32.xlu0 %v1086
        %v1088 = vpop.xlane.xlu0 %1087
        %v1089 = vadd.f32 %v990, %v992
        %1090 = vadd.xlane.f32.xlu0 %v1089
        %v1091 = vpop.xlane.xlu0 %1090
        %v1092 = vadd.f32 %v994, %v996
        %1093 = vadd.xlane.f32.xlu0 %v1092
        %v1094 = vpop.xlane.xlu0 %1093
        %v1095 = vadd.f32 %v998, %v1000
        %1096 = vadd.xlane.f32.xlu0 %v1095
        %v1097 = vpop.xlane.xlu0 %1096
        %v1098 = vadd.f32 %v1002, %v1004
        %1099 = vadd.xlane.f32.xlu0 %v1098
        %v1100 = vpop.xlane.xlu0 %1099
        %v1101 = vrcp.pop %v1007
        %v1102 = vrcp.pop %v1010
        %v1103 = vrcp.pop %v1013
        %v1104 = vrcp.pop %v1016
        %v1105 = vrcp.pop %v1019
        %v1106 = vrcp.pop %v1022
        %v1107 = vrcp.pop %v1025
        %v1108 = vrcp.pop %v1028
        %v1109 = vrcp.pop %v1031
        %v1110 = vrcp.pop %v1034
        %v1111 = vrcp.pop %v1037
        %v1112 = vrcp.pop %v1040
        %v1113 = vrcp.pop %v1043
        %v1114 = vrcp.pop %v1046
        %v1115 = vrcp.pop %v1049
        %v1116 = vrcp.pop %v1052
        %v1117 = vrcp.pop %v1055
        %v1118 = vrcp.pop %v1058
        %v1119 = vrcp.pop %v1061
        %v1120 = vrcp.pop %v1064
        %v1121 = vrcp.pop %v1067
        %v1122 = vrcp.pop %v1070
        %v1123 = vrcp.pop %v1073
        %v1124 = vrcp.pop %v1076
        %v1125 = vrcp.pop %v1079
        %v1126 = vrcp.pop %v1082
        %v1127 = vrcp.pop %v1085
        %v1128 = vrcp.pop %v1088
        %v1129 = vrcp.pop %v1091
        %v1130 = vrcp.pop %v1094
        %v1131 = vrcp.pop %v1097
        %v1132 = vrcp.pop %v1100
        %v1133 = vmul.f32 %v878, %v1101
        %v1134 = vmul.f32 %v880, %v1101
        %v1135 = vmul.f32 %v882, %v1102
        %v1136 = vmul.f32 %v884, %v1102
        %v1137 = vmul.f32 %v886, %v1103
        %v1138 = vmul.f32 %v888, %v1103
        %v1139 = vmul.f32 %v890, %v1104
        %v1140 = vmul.f32 %v892, %v1104
        %v1141 = vmul.f32 %v894, %v1105
        %v1142 = vmul.f32 %v896, %v1105
        %v1143 = vmul.f32 %v898, %v1106
        %v1144 = vmul.f32 %v900, %v1106
        %v1145 = vmul.f32 %v902, %v1107
        %v1146 = vmul.f32 %v904, %v1107
        %v1147 = vmul.f32 %v906, %v1108
        %v1148 = vmul.f32 %v908, %v1108
        %v1149 = vmul.f32 %v910, %v1109
        %v1150 = vmul.f32 %v912, %v1109
        %v1151 = vmul.f32 %v914, %v1110
        %v1152 = vmul.f32 %v916, %v1110
        %v1153 = vmul.f32 %v918, %v1111
        %v1154 = vmul.f32 %v920, %v1111
        %v1155 = vmul.f32 %v922, %v1112
        %v1156 = vmul.f32 %v924, %v1112
        %v1157 = vmul.f32 %v926, %v1113
        %v1158 = vmul.f32 %v928, %v1113
        %v1159 = vmul.f32 %v930, %v1114
        %v1160 = vmul.f32 %v932, %v1114
        %v1161 = vmul.f32 %v934, %v1115
        %v1162 = vmul.f32 %v936, %v1115
        %v1163 = vmul.f32 %v938, %v1116
        %v1164 = vmul.f32 %v940, %v1116
        %v1165 = vmul.f32 %v942, %v1117
        %v1166 = vmul.f32 %v944, %v1117
        %v1167 = vmul.f32 %v946, %v1118
        %v1168 = vmul.f32 %v948, %v1118
        %v1169 = vmul.f32 %v950, %v1119
        %v1170 = vmul.f32 %v952, %v1119
        %v1171 = vmul.f32 %v954, %v1120
        %v1172 = vmul.f32 %v956, %v1120
        %v1173 = vmul.f32 %v958, %v1121
        %v1174 = vmul.f32 %v960, %v1121
        %v1175 = vmul.f32 %v962, %v1122
        %v1176 = vmul.f32 %v964, %v1122
        %v1177 = vmul.f32 %v966, %v1123
        %v1178 = vmul.f32 %v968, %v1123
        %v1179 = vmul.f32 %v970, %v1124
        %v1180 = vmul.f32 %v972, %v1124
        %v1181 = vmul.f32 %v974, %v1125
        %v1182 = vmul.f32 %v976, %v1125
        %v1183 = vmul.f32 %v978, %v1126
        %v1184 = vmul.f32 %v980, %v1126
        %v1185 = vmul.f32 %v982, %v1127
        %v1186 = vmul.f32 %v984, %v1127
        %v1187 = vmul.f32 %v986, %v1128
        %v1188 = vmul.f32 %v988, %v1128
        %v1189 = vmul.f32 %v990, %v1129
        %v1190 = vmul.f32 %v992, %v1129
        %v1191 = vmul.f32 %v994, %v1130
        %v1192 = vmul.f32 %v996, %v1130
        %v1193 = vmul.f32 %v998, %v1131
        %v1194 = vmul.f32 %v1000, %v1131
        %v1195 = vmul.f32 %v1002, %v1132
        %v1196 = vmul.f32 %v1004, %v1132
        %v1197 = vpack.c.bf16 %v1135, %v1133
        %v1198 = vpack.c.bf16 %v1136, %v1134
        %v1199 = vpack.c.bf16 %v1139, %v1137
        %v1200 = vpack.c.bf16 %v1140, %v1138
        %v1201 = vpack.c.bf16 %v1143, %v1141
        %v1202 = vpack.c.bf16 %v1144, %v1142
        %v1203 = vpack.c.bf16 %v1147, %v1145
        %v1204 = vpack.c.bf16 %v1148, %v1146
        %v1205 = vpack.c.bf16 %v1151, %v1149
        %v1206 = vpack.c.bf16 %v1152, %v1150
        %v1207 = vpack.c.bf16 %v1155, %v1153
        %v1208 = vpack.c.bf16 %v1156, %v1154
        %v1209 = vpack.c.bf16 %v1159, %v1157
        %v1210 = vpack.c.bf16 %v1160, %v1158
        %v1211 = vpack.c.bf16 %v1163, %v1161
        %v1212 = vpack.c.bf16 %v1164, %v1162
        %v1213 = vpack.c.bf16 %v1167, %v1165
        %v1214 = vpack.c.bf16 %v1168, %v1166
        %v1215 = vpack.c.bf16 %v1171, %v1169
        %v1216 = vpack.c.bf16 %v1172, %v1170
        %v1217 = vpack.c.bf16 %v1175, %v1173
        %v1218 = vpack.c.bf16 %v1176, %v1174
        %v1219 = vpack.c.bf16 %v1179, %v1177
        %v1220 = vpack.c.bf16 %v1180, %v1178
        %v1221 = vpack.c.bf16 %v1183, %v1181
        %v1222 = vpack.c.bf16 %v1184, %v1182
        %v1223 = vpack.c.bf16 %v1187, %v1185
        %v1224 = vpack.c.bf16 %v1188, %v1186
        %v1225 = vpack.c.bf16 %v1191, %v1189
        %v1226 = vpack.c.bf16 %v1192, %v1190
        %v1227 = vpack.c.bf16 %v1195, %v1193
        %v1228 = vpack.c.bf16 %v1196, %v1194
        %v1229 = vld [vmem:[#allocation4] sm:$0xff]
        %v1230 = vld [vmem:[#allocation4 + $0x8] sm:$0xff]
        %v1231 = vld [vmem:[#allocation4 + $0x10] sm:$0xff]
        %v1232 = vld [vmem:[#allocation4 + $0x18] sm:$0xff]
        %v1235 = vunpack.c.l.b16 %v407
        %v1236 = vunpack.c.h.b16 %v407
        %v1237 = vunpack.c.l.b16 %v408
        %v1238 = vunpack.c.h.b16 %v408
        %v1239 = vpack.c.b16 %v1237, %v1235
        %v1240 = vpack.c.b16 %v1238, %v1236
        %1243 = vmatprep.subr.bf16.mxu0 %v1212
        %1244 = vmatpush1.bf16.msra.mxu0 %v1211
        %1245 = vmatprep.subr.bf16.mxu0 %v1210
        %1246 = vmatpush1.bf16.msra.mxu0 %v1209
        %1247 = vmatprep.subr.bf16.mxu0 %v1208
        %1248 = vmatpush1.bf16.msra.mxu0 %v1207
        %1249 = vmatprep.subr.bf16.mxu0 %v1206
        %1250 = vmatpush1.bf16.msra.mxu0 %v1205
        %1251 = vmatprep.subr.bf16.mxu0 %v1204
        %1252 = vmatpush1.bf16.msra.mxu0 %v1203
        %1253 = vmatprep.subr.bf16.mxu0 %v1202
        %1254 = vmatpush1.bf16.msra.mxu0 %v1201
        %1255 = vmatprep.subr.bf16.mxu0 %v1200
        %1256 = vmatpush1.bf16.msra.mxu0 %v1199
        %1257 = vmatprep.subr.bf16.mxu0 %v1198
        %1258 = vmatpush1.bf16.msra.mxu0 %v1197
        %1259 = vmatprep.subr.bf16.mxu0 %v1228
        %1260 = vmatpush2.bf16.msra.mxu0 %v1227
        %1261 = vmatprep.subr.bf16.mxu0 %v1226
        %1262 = vmatpush2.bf16.msra.mxu0 %v1225
        %1263 = vmatprep.subr.bf16.mxu0 %v1224
        %1264 = vmatpush2.bf16.msra.mxu0 %v1223
        %1265 = vmatprep.subr.bf16.mxu0 %v1222
        %1266 = vmatpush2.bf16.msra.mxu0 %v1221
        %1267 = vmatprep.subr.bf16.mxu0 %v1220
        %1268 = vmatpush2.bf16.msra.mxu0 %v1219
        %1269 = vmatprep.subr.bf16.mxu0 %v1218
        %1270 = vmatpush2.bf16.msra.mxu0 %v1217
        %1271 = vmatprep.subr.bf16.mxu0 %v1216
        %1272 = vmatpush2.bf16.msra.mxu0 %v1215
        %1273 = vmatprep.subr.bf16.mxu0 %v1214
        %1274 = vmatpush2.bf16.msra.mxu0 %v1213
        %1275 = vmatprep.mubr.bf16.mxu0 %v1240
        %1276 = vmatmul.mubr.bf16.gmra.mxu0 %v1239
        %v1277 = vpop.f32.mrf.mxu0
        %v1278 = vadd.f32 0.0, %v1277
        %v1279 = vpop.f32.mrf.mxu0
        %v1280 = vadd.f32 0.0, %v1279
        %v1281 = vpop.f32.mrf.mxu0
        %v1282 = vadd.f32 0.0, %v1281
        %v1283 = vpop.f32.mrf.mxu0
        %v1284 = vadd.f32 0.0, %v1283
        %1285 = vdwg.mxu0
        %v1286 = vadd.f32 %v1229, %v1278
        %v1287 = vadd.f32 %v1230, %v1280
        %v1288 = vadd.f32 %v1231, %v1282
        %v1289 = vadd.f32 %v1232, %v1284
        %1290 = vst [vmem:[#allocation4] sm:$0xff] %v1286
        %1291 = vst [vmem:[#allocation4 + $0x8] sm:$0xff] %v1287
        %1292 = vst [vmem:[#allocation4 + $0x10] sm:$0xff] %v1288
        %1293 = vst [vmem:[#allocation4 + $0x18] sm:$0xff] %v1289
        %1294 = vmatprep.subr.bf16.mxu0 0
        %1295 = vmatpush1.bf16.xpose.msra.mxu0 0
        %1296 = vmatprep.subr.bf16.mxu0 0
        %1297 = vmatpush1.bf16.xpose.msra.mxu0 0
        %1298 = vmatprep.subr.bf16.mxu0 0
        %1299 = vmatpush1.bf16.xpose.msra.mxu0 0
        %1300 = vmatprep.subr.bf16.mxu0 0
        %1301 = vmatpush1.bf16.xpose.msra.mxu0 0
        %1302 = vmatprep.subr.bf16.mxu0 0
        %1303 = vmatpush1.bf16.xpose.msra.mxu0 0
        %1304 = vmatprep.subr.bf16.mxu0 0
        %1305 = vmatpush1.bf16.xpose.msra.mxu0 0
        %1306 = vmatprep.subr.bf16.mxu0 0
        %1307 = vmatpush1.bf16.xpose.msra.mxu0 0
        %1308 = vmatprep.subr.bf16.mxu0 %v249
        %1309 = vmatpush1.bf16.xpose.msra.mxu0 %v248
        %1310 = vmatprep.subr.bf16.mxu0 0
        %1311 = vmatpush2.bf16.xpose.msra.mxu0 0
        %1312 = vmatprep.subr.bf16.mxu0 0
        %1313 = vmatpush2.bf16.xpose.msra.mxu0 0
        %1314 = vmatprep.subr.bf16.mxu0 0
        %1315 = vmatpush2.bf16.xpose.msra.mxu0 0
        %1316 = vmatprep.subr.bf16.mxu0 0
        %1317 = vmatpush2.bf16.xpose.msra.mxu0 0
        %1318 = vmatprep.subr.bf16.mxu0 0
        %1319 = vmatpush2.bf16.xpose.msra.mxu0 0
        %1320 = vmatprep.subr.bf16.mxu0 0
        %1321 = vmatpush2.bf16.xpose.msra.mxu0 0
        %1322 = vmatprep.subr.bf16.mxu0 0
        %1323 = vmatpush2.bf16.xpose.msra.mxu0 0
        %1324 = vmatprep.subr.bf16.mxu0 0
        %1325 = vmatpush2.bf16.xpose.msra.mxu0 0
        %1326 = vmatprep.mubr.bf16.mxu0 %v249
        %1327 = vmatmul.mubr.bf16.gmra.mxu0 %v248
        %v1328 = vpop.f32.mrf.mxu0
        %v1329 = vadd.f32 0.0, %v1328
        %v1330 = vpop.f32.mrf.mxu0
        %v1331 = vpop.f32.mrf.mxu0
        %v1332 = vadd.f32 0.0, %v1331
        %v1333 = vpop.f32.mrf.mxu0
        %1334 = vdwg.mxu0
        %v1335 = vsel %vm257, %v1329, -inf
        %1336 = vmax.xlane.f32.xlu0 %v1335
        %v1337 = vpop.xlane.xlu0 %1336
        %v1338 = vsel %vm257, %v1332, -inf
        %1339 = vmax.xlane.f32.xlu0 %v1338
        %v1340 = vpop.xlane.xlu0 %1339
        %v1341 = vsub.f32 %v1329, %v1337
        %v1342 = vsub.f32 %v1332, %v1340
        %v1343 = vmul.f32 %v1341, 1.442695
        %v1344 = vpow.pop %v1343
        %v1345 = vmul.f32 %v1342, 1.442695
        %v1346 = vpow.pop %v1345
        %v1347 = vsel %vm257, %v1344, 0.0
        %1348 = vadd.xlane.f32.xlu0 %v1347
        %v1349 = vpop.xlane.xlu0 %1348
        %v1350 = vsel %vm257, %v1346, 0.0
        %1351 = vadd.xlane.f32.xlu0 %v1350
        %v1352 = vpop.xlane.xlu0 %1351
        %v1353 = vrcp.pop %v1349
        %v1354 = vrcp.pop %v1352
        %v1355 = vmul.f32 %v1344, %v1353
        %v1356 = vmul.f32 %v1346, %v1354
        %v1357 = vpack.c.bf16 %v1356, %v1355
        %v1359 = vsel %vm257, %v1357, 0
        %1361 = vmatprep.subr.bf16.mxu0 0
        %1362 = vmatpush1.bf16.msra.mxu0 0
        %1363 = vmatprep.subr.bf16.mxu0 0
        %1364 = vmatpush1.bf16.msra.mxu0 0
        %1365 = vmatprep.subr.bf16.mxu0 0
        %1366 = vmatpush1.bf16.msra.mxu0 0
        %1367 = vmatprep.subr.bf16.mxu0 0
        %1368 = vmatpush1.bf16.msra.mxu0 0
        %1369 = vmatprep.subr.bf16.mxu0 0
        %1370 = vmatpush1.bf16.msra.mxu0 0
        %1371 = vmatprep.subr.bf16.mxu0 0
        %1372 = vmatpush1.bf16.msra.mxu0 0
        %1373 = vmatprep.subr.bf16.mxu0 0
        %1374 = vmatpush1.bf16.msra.mxu0 0
        %1375 = vmatprep.subr.bf16.mxu0 %v249
        %1376 = vmatpush1.bf16.msra.mxu0 %v248
        %1377 = vmatprep.subr.bf16.mxu0 0
        %1378 = vmatpush2.bf16.msra.mxu0 0
        %1379 = vmatprep.subr.bf16.mxu0 0
        %1380 = vmatpush2.bf16.msra.mxu0 0
        %1381 = vmatprep.subr.bf16.mxu0 0
        %1382 = vmatpush2.bf16.msra.mxu0 0
        %1383 = vmatprep.subr.bf16.mxu0 0
        %1384 = vmatpush2.bf16.msra.mxu0 0
        %1385 = vmatprep.subr.bf16.mxu0 0
        %1386 = vmatpush2.bf16.msra.mxu0 0
        %1387 = vmatprep.subr.bf16.mxu0 0
        %1388 = vmatpush2.bf16.msra.mxu0 0
        %1389 = vmatprep.subr.bf16.mxu0 0
        %1390 = vmatpush2.bf16.msra.mxu0 0
        %1391 = vmatprep.subr.bf16.mxu0 0
        %1392 = vmatpush2.bf16.msra.mxu0 0
        %1393 = vmatprep.mubr.bf16.mxu0 0
        %1394 = vmatmul.mubr.bf16.gmra.mxu0 %v1359
        %v1395 = vpop.f32.mrf.mxu0
        %v1396 = vadd.f32 0.0, %v1395
        %v1397 = vpop.f32.mrf.mxu0
        %v1398 = vadd.f32 0.0, %v1397
        %v1399 = vpop.f32.mrf.mxu0
        %v1400 = vadd.f32 0.0, %v1399
        %v1401 = vpop.f32.mrf.mxu0
        %v1402 = vadd.f32 0.0, %v1401
        %1403 = vdwg.mxu0
        %v1404 = vmul.f32 %v244, 2.0
        %v1405 = vmul.f32 %v245, 2.0
        %v1406 = vmul.f32 %v246, 2.0
        %v1407 = vmul.f32 %v247, 2.0
        %v1408 = vld [vmem:[#allocation4] sm:$0xff]
        %v1409 = vld [vmem:[#allocation4 + $0x8] sm:$0xff]
        %v1410 = vld [vmem:[#allocation4 + $0x10] sm:$0xff]
        %v1411 = vld [vmem:[#allocation4 + $0x18] sm:$0xff]
        %v1412 = vadd.f32 %v1404, %v1408
        %v1413 = vadd.f32 %v1405, %v1409
        %v1414 = vadd.f32 %v1406, %v1410
        %v1415 = vadd.f32 %v1407, %v1411
        %v1416 = vadd.f32 %v1412, %v1396
        %v1417 = vadd.f32 %v1413, %v1398
        %v1418 = vadd.f32 %v1414, %v1400
        %v1419 = vadd.f32 %v1415, %v1402
        %1420 = vst [vmem:[%s242] sm:$0xff] %v1416
        %1421 = vst [vmem:[%s242 + $0x8] sm:$0xff] %v1417
        %1422 = vst [vmem:[%s242 + $0x10] sm:$0xff] %v1418
        %1423 = vst [vmem:[%s242 + $0x18] sm:$0xff] %v1419
        %s1424 = sand.u32 %s140, 1
        %s1425 = scalar_lea.sflag [#allocation7], %s1424
        %s1426 = sand.u32 %s140, 1
        %s1427 = smul.addr %s1426, 32
        %s1428 = scalar_lea.vmem [#allocation8], %s1427
        // Predicated region
        $region45: #{tpu_custom_call.1} parent=39 // pred_check
          %p1429 = pneg %p150
        $region46: #{tpu_custom_call.1} parent=39 // pred_check_branch
          %1431 = sbr.rel (%p1429) target = $region48
        $region47: #{tpu_custom_call.1} parent=39 // pred_region
          %s1433 = ssub.s32 512, 512
          %1434 = vsyncadd %s1425, %s1433
          %s1435 = smul.addr %s22, 4
          %s1436 = smul.addr %s1435, 128
          %s1437 = scalar_lea.hbm %s5, %s1436
          %s1438 = sshll.u32 %s1428, 4
          %s1439 = int_to_ptr.vmem [resolvable:$true] %s1438
          %1444 = dma.vmem_to_hbm [thread:$0]  %s1439, 512, %s1437, %s1425, 256, 256, 16
        $region48: #{tpu_custom_call.1} parent=39 // pred_fallthru
          _
      $region40: #{tpu_custom_call.1} parent=5 // pred_fallthru
        _
      %p1445 = scmp.le.s32.totalorder 2, %s17
      // Predicated region
      $region49: #{tpu_custom_call.1} parent=5 // pred_check
        %p1446 = pneg %p1445
      $region50: #{tpu_custom_call.1} parent=5 // pred_check_branch
        %1448 = sbr.rel (%p1446) target = $region52
      $region51: #{tpu_custom_call.1} parent=5 // pred_region
        %s1449 = ssub.s32 %s17, 2
        // Predicated region
        $region53: #{tpu_custom_call.1} parent=51 // pred_check
          %p1450 = pneg %p156
        $region54: #{tpu_custom_call.1} parent=51 // pred_check_branch
          %1452 = sbr.rel (%p1450) target = $region56
        $region55: #{tpu_custom_call.1} parent=51 // pred_region
          %s1453 = sand.u32 %s141, 1
          %s1454 = scalar_lea.sflag [#allocation7], %s1453
          %s1455 = sand.u32 %s141, 1
          %s1456 = smul.addr %s1455, 32
          %s1457 = scalar_lea.vmem [#allocation8], %s1456
          %1458 = dma.done %s1454, 512
        $region56: #{tpu_custom_call.1} parent=51 // pred_fallthru
          _
      $region52: #{tpu_custom_call.1} parent=5 // pred_fallthru
        _
    $region6: #{tpu_custom_call.1} parent=1 // loop_footer
      %s21 = sadd.s32 1, %s17
    $region7: #{tpu_custom_call.1} parent=1 // loop_footer_branch
      %16 = sbr.rel target = $region3
    $region8: #{tpu_custom_call.1} parent=1 // loop_exit
      _
    %1459 = vsyncpa [#allocation6], 1
    %s1460 = scalar_lea.sflag [#allocation6], 1
    %1461 = vsyncpa %s1460, 1
    %1462 = vsyncpa [#allocation7], 1
    %s1463 = scalar_lea.sflag [#allocation7], 1
    %1464 = vsyncpa %s1463, 1

</llo_original>
